<compile_context>
chip_gen: v7x
topology: tpu7x:2x2x1
jax: 0.10.0
libtpu: 0.0.40
codegen_flags: <defaults>
</compile_context>

<pallas_src>
import functools
import numpy as np
import jax
import jax.numpy as jnp
from jax.experimental import pallas as pl
from jax.experimental.pallas import tpu as pltpu

FC1_DIM = 128   # nn.Linear(width, 128) in the reference module


# -------------------------- Pallas kernel --------------------------------- #
def _fno1d_kernel(num_layers, tb, L, W,
                  h0_ref, pqcat_ref, pool_ref, wcat_ref, bcat_ref, fc1_ref,
                  out_ref, ustack_ref):
    """One grid step = tb samples; activations kept as (tb*L, W) spatial-major."""
    f32 = jnp.float32
    tbl = tb * L
    h = h0_ref[...]                                       # (tbl, W) fc0 output

    for layer in range(num_layers):                       # static unroll
        wcat = wcat_ref[layer]                            # (W, 3W) = [Wr|Wi|Wc]
        u = jnp.dot(h, wcat, preferred_element_type=f32)  # (tbl, 3W)
        # Stack [u_r; u_i] so spatial mixing is one K = 2*tbl contraction.
        ustack_ref[0:tbl, :] = u[:, 0:W]
        ustack_ref[tbl:2 * tbl, :] = u[:, W:2 * W]
        x1 = jnp.dot(pqcat_ref[...], ustack_ref[...],     # (tbl,2tbl)@(2tbl,W)
                     preferred_element_type=f32)
        h = jnp.maximum(x1 + u[:, 2 * W:3 * W] + bcat_ref[layer], 0.0)

    # Mean over L as a matmul (Pool = kron(I_tb, 1/L)), then fc1 + relu fused
    # so the kernel writes a lane-dense (tb, 128) block.
    pooled = jnp.dot(pool_ref[...], h, preferred_element_type=f32)    # (tb, W)
    z = jnp.dot(pooled, fc1_ref[0:W, :], preferred_element_type=f32)  # (tb, 128)
    out_ref[...] = jnp.maximum(z + fc1_ref[W:W + 1, :], 0.0)


# -------------------------- wrapper (glue) --------------------------------- #
def _spatial_operators(L, modes):
    """Exact real (L,L) operators P,Q s.t. irfft_trunc(rfft_trunc(h) @ Weff)
    == P @ h @ Re(Weff) + Q @ h @ Im(Weff)  (h spatial-major, per sample)."""
    k = np.arange(modes)
    l = np.arange(L)
    ang = 2.0 * np.pi * np.outer(k, l) / L                   # (modes, L)
    C = np.cos(ang)
    Sn = -np.sin(ang)
    coef = np.full((modes,), 2.0 / L)
    coef[0] = 1.0 / L
    if L % 2 == 0 and modes == L // 2 + 1:
        coef[-1] = 1.0 / L
    ang2 = 2.0 * np.pi * np.outer(l, k) / L                  # (L, modes)
    Ci = coef[None, :] * np.cos(ang2)
    Si = -coef[None, :] * np.sin(ang2)
    P = Ci @ C + Si @ Sn
    Q = Si @ C - Ci @ Sn
    return P, Q


def fno1d_pallas(x, params, *, modes, width, output_dim, num_layers, tb=8):
    B, cin, L = x.shape
    assert cin == 1
    assert modes <= L // 2 + 1
    W = width
    tbl = tb * L

    # ---- batch blocking; keep grid even so v7x's two TCs stay balanced ----
    n_blk = -(-B // tb)
    if n_blk % 2:
        n_blk += 1
    Bp = n_blk * tb

    # ---- fc0 in the wrapper -> kernel streams lane-dense (tbl, W) blocks ----
    x_flat = x[:, 0, :].astype(jnp.float32).reshape(B * L)
    if Bp > B:
        x_flat = jnp.concatenate(
            [x_flat, jnp.zeros(((Bp - B) * L,), jnp.float32)])
    h0 = (x_flat[:, None] * params["fc0_w"][:, 0][None, :]
          + params["fc0_b"][None, :]).astype(jnp.float32)        # (Bp*L, W)

    # ---- fused spatial operators: [P_big | Q_big] and the pooling matrix ----
    P, Q = _spatial_operators(L, modes)
    eye = np.eye(tb, dtype=np.float64)
    pqcat = np.concatenate([np.kron(eye, P), np.kron(eye, Q)],
                           axis=1).astype(np.float32)            # (tbl, 2*tbl)
    pool = np.kron(eye, np.full((1, L), 1.0 / L)).astype(np.float32)  # (tb, tbl)

    # ---- packed per-layer channel weights [Wr | Wi | Wconv] and biases ----
    weff = jnp.sum(params["spec_w"], axis=-1)                    # (nl, W, W) cplx
    spec_r = jnp.real(weff).astype(jnp.float32)
    spec_i = jnp.imag(weff).astype(jnp.float32)
    conv_wT = jnp.transpose(params["conv_w"][..., 0], (0, 2, 1))  # (nl, Win, Wout)
    wcat = jnp.concatenate([spec_r, spec_i, conv_wT], axis=2).astype(jnp.float32)
    bcat = params["conv_b"][:, None, :].astype(jnp.float32)      # (nl, 1, W)
    fc1_pack = jnp.concatenate(
        [params["fc1_w"].T, params["fc1_b"][None, :]],
        axis=0).astype(jnp.float32)                              # (W+1, 128)

    def invariant(shape):
        nd = len(shape)
        return pl.BlockSpec(tuple(shape), lambda b, _nd=nd: (0,) * _nd)

    z = pl.pallas_call(
        functools.partial(_fno1d_kernel, num_layers, tb, L, W),
        out_shape=jax.ShapeDtypeStruct((Bp, FC1_DIM), jnp.float32),
        grid=(Bp // tb,),
        in_specs=[
            pl.BlockSpec((tbl, W), lambda b: (b, 0)),    # fc0 activations
            invariant((tbl, 2 * tbl)),                   # [P_big | Q_big]
            invariant((tb, tbl)),                        # mean-pool operator
            invariant((num_layers, W, 3 * W)),           # fused channel weights
            invariant((num_layers, 1, W)),               # conv biases
            invariant((W + 1, FC1_DIM)),                 # fc1 weight^T + bias
        ],
        out_specs=pl.BlockSpec((tb, FC1_DIM), lambda b: (b, 0)),
        scratch_shapes=[pltpu.VMEM((2 * tbl, W), jnp.float32)],
        compiler_params=pltpu.CompilerParams(
            dimension_semantics=("parallel",)),
    )(h0, jnp.asarray(pqcat), jnp.asarray(pool), wcat, bcat, fc1_pack)

    z = z[:B]                                            # drop padded rows

    # ---- three tiny heads fused into one XLA GEMM (HIGHEST: f32-exact tail) ----
    head_w = jnp.concatenate(
        [params["hf_w"], params["ht_w"], params["br_w"]], axis=0)   # (2+out, 128)
    head_b = jnp.concatenate(
        [params["hf_b"], params["ht_b"], params["br_b"]], axis=0)
    heads = (jnp.dot(z, head_w.T, precision=jax.lax.Precision.HIGHEST)
             + head_b[None, :])
    hf = heads[:, 0:1]
    ht = heads[:, 1:2]
    br = heads[:, 2:2 + output_dim]
    return hf, ht, br


# -------------------------- pure-JAX reference ------------------------------ #
def fno1d_ref(x, params, *, modes, width, output_dim, num_layers):
    B, _, L = x.shape
    xt = jnp.transpose(x, (0, 2, 1))                           # (B, L, 1)
    h = xt @ params["fc0_w"].T + params["fc0_b"]               # (B, L, W)
    h = jnp.transpose(h, (0, 2, 1))                            # (B, W, L)
    for i in range(num_layers):
        xft = jnp.fft.rfft(h.astype(jnp.float32), axis=-1)
        weff = jnp.sum(params["spec_w"][i], axis=-1)           # sum over modes j
        out_modes = jnp.einsum('bik,io->bok', xft[:, :, :modes], weff)
        out_ft = jnp.zeros((B, width, L // 2 + 1), dtype=jnp.complex64)
        out_ft = out_ft.at[:, :, :modes].set(out_modes)
        x1 = jnp.fft.irfft(out_ft, n=L, axis=-1)
        x2 = (jnp.einsum('oi,bil->bol', params["conv_w"][i][:, :, 0], h)
              + params["conv_b"][i][None, :, None])
        h = jax.nn.relu(x1 + x2)
    pooled = jnp.mean(h, axis=-1)                              # (B, W)
    z = jax.nn.relu(pooled @ params["fc1_w"].T + params["fc1_b"])
    hf = z @ params["hf_w"].T + params["hf_b"]
    ht = z @ params["ht_w"].T + params["ht_b"]
    br = z @ params["br_w"].T + params["br_b"]
    return hf, ht, br


# -------------------------- parameter init --------------------------------- #
def init_params(key, *, modes, width, output_dim, num_layers):
    ks = jax.random.split(key, 16)
    u = lambda k, shape, bound: jax.random.uniform(
        k, shape, jnp.float32, minval=-bound, maxval=bound)
    scale = 1.0 / (width * width)
    spec_re = scale * jax.random.uniform(
        ks[0], (num_layers, width, width, modes), jnp.float32)
    spec_im = scale * jax.random.uniform(
        ks[1], (num_layers, width, width, modes), jnp.float32)
    params = {
        "fc0_w": u(ks[2], (width, 1), 1.0),
        "fc0_b": u(ks[3], (width,), 1.0),
        "spec_w": (spec_re + 1j * spec_im).astype(jnp.complex64),
        "conv_w": u(ks[4], (num_layers, width, width, 1), 1.0 / np.sqrt(width)),
        "conv_b": u(ks[5], (num_layers, width), 1.0 / np.sqrt(width)),
        "fc1_w": u(ks[6], (128, width), 1.0 / np.sqrt(width)),
        "fc1_b": u(ks[7], (128,), 1.0 / np.sqrt(width)),
        "hf_w": u(ks[8], (1, 128), 1.0 / np.sqrt(128)),
        "hf_b": u(ks[9], (1,), 1.0 / np.sqrt(128)),
        "ht_w": u(ks[10], (1, 128), 1.0 / np.sqrt(128)),
        "ht_b": u(ks[11], (1,), 1.0 / np.sqrt(128)),
        "br_w": u(ks[12], (output_dim, 128), 1.0 / np.sqrt(128)),
        "br_b": u(ks[13], (output_dim,), 1.0 / np.sqrt(128)),
    }
    return params


if __name__ == "__main__":
    B, L = 12, 16                     # B not a multiple of TB: exercises padding
    MODES, WIDTH, OUT_DIM, NUM_LAYERS = 6, 32, 3, 4
    TB = 8                            # samples per grid step -> M = TB*L = 128

    key = jax.random.PRNGKey(0)
    kx, kp = jax.random.split(key)
    x = jax.random.normal(kx, (B, 1, L), jnp.float32)          # torch NCL, C=1
    params = init_params(kp, modes=MODES, width=WIDTH,
                         output_dim=OUT_DIM, num_layers=NUM_LAYERS)

    hf, ht, br = fno1d_pallas(x, params, modes=MODES, width=WIDTH,
                              output_dim=OUT_DIM, num_layers=NUM_LAYERS, tb=TB)
    jax.block_until_ready((hf, ht, br))

    with jax.default_matmul_precision("float32"):              # f32-exact reference
        hf_r, ht_r, br_r = fno1d_ref(x, params, modes=MODES, width=WIDTH,
                                     output_dim=OUT_DIM, num_layers=NUM_LAYERS)
    for a, b in ((hf, hf_r), (ht, ht_r), (br, br_r)):
        np.testing.assert_allclose(np.asarray(a), np.asarray(b),
                                   rtol=2e-3, atol=2e-3)

    print("KERNEL_OK")
</pallas_src>

<mosaic_0001>
module attributes {stable_mosaic.version = 11 : i64} {
  func.func @_fno1d_kernel(%arg0: i32, %arg1: memref<128x32xf32, #tpu.memory_space<vmem>>, %arg2: memref<128x256xf32, #tpu.memory_space<vmem>>, %arg3: memref<8x128xf32, #tpu.memory_space<vmem>>, %arg4: memref<4x32x96xf32, #tpu.memory_space<vmem>>, %arg5: memref<4x1x32xf32, #tpu.memory_space<vmem>>, %arg6: memref<33x128xf32, #tpu.memory_space<vmem>>, %arg7: memref<8x128xf32, #tpu.memory_space<vmem>>, %arg8: memref<256x32xf32, #tpu.memory_space<vmem>>) attributes {dimension_semantics = [#tpu.dimension_semantics<parallel>], iteration_bounds = array<i64: 2>, scalar_prefetch = 0 : i64, scratch_operands = 1 : i64, tpu.core_type = #tpu.core_type<tc>, window_params = [{transform_indices = @transform_0, window_bounds = array<i64: 128, 32>}, {pipeline_mode = #tpu.pipeline_mode<synchronous>, transform_indices = @transform_1, window_bounds = array<i64: 128, 256>}, {pipeline_mode = #tpu.pipeline_mode<synchronous>, transform_indices = @transform_2, window_bounds = array<i64: 8, 128>}, {pipeline_mode = #tpu.pipeline_mode<synchronous>, transform_indices = @transform_3, window_bounds = array<i64: 4, 32, 96>}, {pipeline_mode = #tpu.pipeline_mode<synchronous>, transform_indices = @transform_4, window_bounds = array<i64: 4, 1, 32>}, {pipeline_mode = #tpu.pipeline_mode<synchronous>, transform_indices = @transform_5, window_bounds = array<i64: 33, 128>}, {transform_indices = @transform_6, window_bounds = array<i64: 8, 128>}]} {
    %c0 = arith.constant 0 : index
    %c0_0 = arith.constant 0 : index
    %0 = vector.load %arg1[%c0, %c0_0] : memref<128x32xf32, #tpu.memory_space<vmem>>, vector<128x32xf32>
    %c0_1 = arith.constant 0 : index
    %c0_2 = arith.constant 0 : index
    %c0_3 = arith.constant 0 : index
    %1 = vector.load %arg4[%c0_1, %c0_2, %c0_3] : memref<4x32x96xf32, #tpu.memory_space<vmem>>, vector<1x32x96xf32>
    %2 = vector.shape_cast %1 : vector<1x32x96xf32> to vector<32x96xf32>
    %cst = arith.constant dense<0.000000e+00> : vector<128x96xf32>
    %3 = tpu.matmul %0, %2, %cst {dimension_numbers = #tpu.dot_dimension_numbers<[1], [0], [0], [1], [0, 0, 1, 1], [], []>} : vector<128x32xf32>, vector<32x96xf32>, vector<128x96xf32> -> vector<128x96xf32>
    %4 = vector.extract_strided_slice %3 {offsets = [0, 0], sizes = [128, 32], strides = [1, 1]} : vector<128x96xf32> to vector<128x32xf32>
    %c0_4 = arith.constant 0 : index
    %c0_5 = arith.constant 0 : index
    %5 = vector.load %arg8[%c0_4, %c0_5] : memref<256x32xf32, #tpu.memory_space<vmem>>, vector<128x32xf32>
    tpu.vector_store %arg8[%c0_4, %c0_5], %4 {strides = array<i32>} : memref<256x32xf32, #tpu.memory_space<vmem>>, vector<128x32xf32>,
    %6 = vector.extract_strided_slice %3 {offsets = [0, 32], sizes = [128, 32], strides = [1, 1]} : vector<128x96xf32> to vector<128x32xf32>
    %c128 = arith.constant 128 : index
    %c0_6 = arith.constant 0 : index
    %7 = vector.load %arg8[%c128, %c0_6] : memref<256x32xf32, #tpu.memory_space<vmem>>, vector<128x32xf32>
    tpu.vector_store %arg8[%c128, %c0_6], %6 {strides = array<i32>} : memref<256x32xf32, #tpu.memory_space<vmem>>, vector<128x32xf32>,
    %c0_7 = arith.constant 0 : index
    %c0_8 = arith.constant 0 : index
    %8 = vector.load %arg2[%c0_7, %c0_8] : memref<128x256xf32, #tpu.memory_space<vmem>>, vector<128x256xf32>
    %c0_9 = arith.constant 0 : index
    %c0_10 = arith.constant 0 : index
    %9 = vector.load %arg8[%c0_9, %c0_10] : memref<256x32xf32, #tpu.memory_space<vmem>>, vector<256x32xf32>
    %cst_11 = arith.constant dense<0.000000e+00> : vector<128x32xf32>
    %10 = tpu.matmul %8, %9, %cst_11 {dimension_numbers = #tpu.dot_dimension_numbers<[1], [0], [0], [1], [0, 0, 1, 1], [], []>} : vector<128x256xf32>, vector<256x32xf32>, vector<128x32xf32> -> vector<128x32xf32>
    %11 = vector.extract_strided_slice %3 {offsets = [0, 64], sizes = [128, 32], strides = [1, 1]} : vector<128x96xf32> to vector<128x32xf32>
    %12 = arith.addf %10, %11 : vector<128x32xf32>
    %c0_12 = arith.constant 0 : index
    %c0_13 = arith.constant 0 : index
    %c0_14 = arith.constant 0 : index
    %13 = vector.load %arg5[%c0_12, %c0_13, %c0_14] : memref<4x1x32xf32, #tpu.memory_space<vmem>>, vector<1x1x32xf32>
    %14 = vector.shape_cast %13 : vector<1x1x32xf32> to vector<1x32xf32>
    %15 = vector.broadcast %14 : vector<1x32xf32> to vector<128x32xf32>
    %16 = arith.addf %12, %15 : vector<128x32xf32>
    %cst_15 = arith.constant 0.000000e+00 : f32
    %17 = vector.broadcast %cst_15 : f32 to vector<128x32xf32>
    %18 = arith.maximumf %16, %17 : vector<128x32xf32>
    %c1 = arith.constant 1 : index
    %c0_16 = arith.constant 0 : index
    %c0_17 = arith.constant 0 : index
    %19 = vector.load %arg4[%c1, %c0_16, %c0_17] : memref<4x32x96xf32, #tpu.memory_space<vmem>>, vector<1x32x96xf32>
    %20 = vector.shape_cast %19 : vector<1x32x96xf32> to vector<32x96xf32>
    %cst_18 = arith.constant dense<0.000000e+00> : vector<128x96xf32>
    %21 = tpu.matmul %18, %20, %cst_18 {dimension_numbers = #tpu.dot_dimension_numbers<[1], [0], [0], [1], [0, 0, 1, 1], [], []>} : vector<128x32xf32>, vector<32x96xf32>, vector<128x96xf32> -> vector<128x96xf32>
    %22 = vector.extract_strided_slice %21 {offsets = [0, 0], sizes = [128, 32], strides = [1, 1]} : vector<128x96xf32> to vector<128x32xf32>
    %c0_19 = arith.constant 0 : index
    %c0_20 = arith.constant 0 : index
    %23 = vector.load %arg8[%c0_19, %c0_20] : memref<256x32xf32, #tpu.memory_space<vmem>>, vector<128x32xf32>
    tpu.vector_store %arg8[%c0_19, %c0_20], %22 {strides = array<i32>} : memref<256x32xf32, #tpu.memory_space<vmem>>, vector<128x32xf32>,
    %24 = vector.extract_strided_slice %21 {offsets = [0, 32], sizes = [128, 32], strides = [1, 1]} : vector<128x96xf32> to vector<128x32xf32>
    %c128_21 = arith.constant 128 : index
    %c0_22 = arith.constant 0 : index
    %25 = vector.load %arg8[%c128_21, %c0_22] : memref<256x32xf32, #tpu.memory_space<vmem>>, vector<128x32xf32>
    tpu.vector_store %arg8[%c128_21, %c0_22], %24 {strides = array<i32>} : memref<256x32xf32, #tpu.memory_space<vmem>>, vector<128x32xf32>,
    %c0_23 = arith.constant 0 : index
    %c0_24 = arith.constant 0 : index
    %26 = vector.load %arg2[%c0_23, %c0_24] : memref<128x256xf32, #tpu.memory_space<vmem>>, vector<128x256xf32>
    %c0_25 = arith.constant 0 : index
    %c0_26 = arith.constant 0 : index
    %27 = vector.load %arg8[%c0_25, %c0_26] : memref<256x32xf32, #tpu.memory_space<vmem>>, vector<256x32xf32>
    %cst_27 = arith.constant dense<0.000000e+00> : vector<128x32xf32>
    %28 = tpu.matmul %26, %27, %cst_27 {dimension_numbers = #tpu.dot_dimension_numbers<[1], [0], [0], [1], [0, 0, 1, 1], [], []>} : vector<128x256xf32>, vector<256x32xf32>, vector<128x32xf32> -> vector<128x32xf32>
    %29 = vector.extract_strided_slice %21 {offsets = [0, 64], sizes = [128, 32], strides = [1, 1]} : vector<128x96xf32> to vector<128x32xf32>
    %30 = arith.addf %28, %29 : vector<128x32xf32>
    %c1_28 = arith.constant 1 : index
    %c0_29 = arith.constant 0 : index
    %c0_30 = arith.constant 0 : index
    %31 = vector.load %arg5[%c1_28, %c0_29, %c0_30] : memref<4x1x32xf32, #tpu.memory_space<vmem>>, vector<1x1x32xf32>
    %32 = vector.shape_cast %31 : vector<1x1x32xf32> to vector<1x32xf32>
    %33 = vector.broadcast %32 : vector<1x32xf32> to vector<128x32xf32>
    %34 = arith.addf %30, %33 : vector<128x32xf32>
    %cst_31 = arith.constant 0.000000e+00 : f32
    %35 = vector.broadcast %cst_31 : f32 to vector<128x32xf32>
    %36 = arith.maximumf %34, %35 : vector<128x32xf32>
    %c2 = arith.constant 2 : index
    %c0_32 = arith.constant 0 : index
    %c0_33 = arith.constant 0 : index
    %37 = vector.load %arg4[%c2, %c0_32, %c0_33] : memref<4x32x96xf32, #tpu.memory_space<vmem>>, vector<1x32x96xf32>
    %38 = vector.shape_cast %37 : vector<1x32x96xf32> to vector<32x96xf32>
    %cst_34 = arith.constant dense<0.000000e+00> : vector<128x96xf32>
    %39 = tpu.matmul %36, %38, %cst_34 {dimension_numbers = #tpu.dot_dimension_numbers<[1], [0], [0], [1], [0, 0, 1, 1], [], []>} : vector<128x32xf32>, vector<32x96xf32>, vector<128x96xf32> -> vector<128x96xf32>
    %40 = vector.extract_strided_slice %39 {offsets = [0, 0], sizes = [128, 32], strides = [1, 1]} : vector<128x96xf32> to vector<128x32xf32>
    %c0_35 = arith.constant 0 : index
    %c0_36 = arith.constant 0 : index
    %41 = vector.load %arg8[%c0_35, %c0_36] : memref<256x32xf32, #tpu.memory_space<vmem>>, vector<128x32xf32>
    tpu.vector_store %arg8[%c0_35, %c0_36], %40 {strides = array<i32>} : memref<256x32xf32, #tpu.memory_space<vmem>>, vector<128x32xf32>,
    %42 = vector.extract_strided_slice %39 {offsets = [0, 32], sizes = [128, 32], strides = [1, 1]} : vector<128x96xf32> to vector<128x32xf32>
    %c128_37 = arith.constant 128 : index
    %c0_38 = arith.constant 0 : index
    %43 = vector.load %arg8[%c128_37, %c0_38] : memref<256x32xf32, #tpu.memory_space<vmem>>, vector<128x32xf32>
    tpu.vector_store %arg8[%c128_37, %c0_38], %42 {strides = array<i32>} : memref<256x32xf32, #tpu.memory_space<vmem>>, vector<128x32xf32>,
    %c0_39 = arith.constant 0 : index
    %c0_40 = arith.constant 0 : index
    %44 = vector.load %arg2[%c0_39, %c0_40] : memref<128x256xf32, #tpu.memory_space<vmem>>, vector<128x256xf32>
    %c0_41 = arith.constant 0 : index
    %c0_42 = arith.constant 0 : index
    %45 = vector.load %arg8[%c0_41, %c0_42] : memref<256x32xf32, #tpu.memory_space<vmem>>, vector<256x32xf32>
    %cst_43 = arith.constant dense<0.000000e+00> : vector<128x32xf32>
    %46 = tpu.matmul %44, %45, %cst_43 {dimension_numbers = #tpu.dot_dimension_numbers<[1], [0], [0], [1], [0, 0, 1, 1], [], []>} : vector<128x256xf32>, vector<256x32xf32>, vector<128x32xf32> -> vector<128x32xf32>
    %47 = vector.extract_strided_slice %39 {offsets = [0, 64], sizes = [128, 32], strides = [1, 1]} : vector<128x96xf32> to vector<128x32xf32>
    %48 = arith.addf %46, %47 : vector<128x32xf32>
    %c2_44 = arith.constant 2 : index
    %c0_45 = arith.constant 0 : index
    %c0_46 = arith.constant 0 : index
    %49 = vector.load %arg5[%c2_44, %c0_45, %c0_46] : memref<4x1x32xf32, #tpu.memory_space<vmem>>, vector<1x1x32xf32>
    %50 = vector.shape_cast %49 : vector<1x1x32xf32> to vector<1x32xf32>
    %51 = vector.broadcast %50 : vector<1x32xf32> to vector<128x32xf32>
    %52 = arith.addf %48, %51 : vector<128x32xf32>
    %cst_47 = arith.constant 0.000000e+00 : f32
    %53 = vector.broadcast %cst_47 : f32 to vector<128x32xf32>
    %54 = arith.maximumf %52, %53 : vector<128x32xf32>
    %c3 = arith.constant 3 : index
    %c0_48 = arith.constant 0 : index
    %c0_49 = arith.constant 0 : index
    %55 = vector.load %arg4[%c3, %c0_48, %c0_49] : memref<4x32x96xf32, #tpu.memory_space<vmem>>, vector<1x32x96xf32>
    %56 = vector.shape_cast %55 : vector<1x32x96xf32> to vector<32x96xf32>
    %cst_50 = arith.constant dense<0.000000e+00> : vector<128x96xf32>
    %57 = tpu.matmul %54, %56, %cst_50 {dimension_numbers = #tpu.dot_dimension_numbers<[1], [0], [0], [1], [0, 0, 1, 1], [], []>} : vector<128x32xf32>, vector<32x96xf32>, vector<128x96xf32> -> vector<128x96xf32>
    %58 = vector.extract_strided_slice %57 {offsets = [0, 0], sizes = [128, 32], strides = [1, 1]} : vector<128x96xf32> to vector<128x32xf32>
    %c0_51 = arith.constant 0 : index
    %c0_52 = arith.constant 0 : index
    %59 = vector.load %arg8[%c0_51, %c0_52] : memref<256x32xf32, #tpu.memory_space<vmem>>, vector<128x32xf32>
    tpu.vector_store %arg8[%c0_51, %c0_52], %58 {strides = array<i32>} : memref<256x32xf32, #tpu.memory_space<vmem>>, vector<128x32xf32>,
    %60 = vector.extract_strided_slice %57 {offsets = [0, 32], sizes = [128, 32], strides = [1, 1]} : vector<128x96xf32> to vector<128x32xf32>
    %c128_53 = arith.constant 128 : index
    %c0_54 = arith.constant 0 : index
    %61 = vector.load %arg8[%c128_53, %c0_54] : memref<256x32xf32, #tpu.memory_space<vmem>>, vector<128x32xf32>
    tpu.vector_store %arg8[%c128_53, %c0_54], %60 {strides = array<i32>} : memref<256x32xf32, #tpu.memory_space<vmem>>, vector<128x32xf32>,
    %c0_55 = arith.constant 0 : index
    %c0_56 = arith.constant 0 : index
    %62 = vector.load %arg2[%c0_55, %c0_56] : memref<128x256xf32, #tpu.memory_space<vmem>>, vector<128x256xf32>
    %c0_57 = arith.constant 0 : index
    %c0_58 = arith.constant 0 : index
    %63 = vector.load %arg8[%c0_57, %c0_58] : memref<256x32xf32, #tpu.memory_space<vmem>>, vector<256x32xf32>
    %cst_59 = arith.constant dense<0.000000e+00> : vector<128x32xf32>
    %64 = tpu.matmul %62, %63, %cst_59 {dimension_numbers = #tpu.dot_dimension_numbers<[1], [0], [0], [1], [0, 0, 1, 1], [], []>} : vector<128x256xf32>, vector<256x32xf32>, vector<128x32xf32> -> vector<128x32xf32>
    %65 = vector.extract_strided_slice %57 {offsets = [0, 64], sizes = [128, 32], strides = [1, 1]} : vector<128x96xf32> to vector<128x32xf32>
    %66 = arith.addf %64, %65 : vector<128x32xf32>
    %c3_60 = arith.constant 3 : index
    %c0_61 = arith.constant 0 : index
    %c0_62 = arith.constant 0 : index
    %67 = vector.load %arg5[%c3_60, %c0_61, %c0_62] : memref<4x1x32xf32, #tpu.memory_space<vmem>>, vector<1x1x32xf32>
    %68 = vector.shape_cast %67 : vector<1x1x32xf32> to vector<1x32xf32>
    %69 = vector.broadcast %68 : vector<1x32xf32> to vector<128x32xf32>
    %70 = arith.addf %66, %69 : vector<128x32xf32>
    %cst_63 = arith.constant 0.000000e+00 : f32
    %71 = vector.broadcast %cst_63 : f32 to vector<128x32xf32>
    %72 = arith.maximumf %70, %71 : vector<128x32xf32>
    %c0_64 = arith.constant 0 : index
    %c0_65 = arith.constant 0 : index
    %73 = vector.load %arg3[%c0_64, %c0_65] : memref<8x128xf32, #tpu.memory_space<vmem>>, vector<8x128xf32>
    %cst_66 = arith.constant dense<0.000000e+00> : vector<8x32xf32>
    %74 = tpu.matmul %73, %72, %cst_66 {dimension_numbers = #tpu.dot_dimension_numbers<[1], [0], [0], [1], [0, 0, 1, 1], [], []>} : vector<8x128xf32>, vector<128x32xf32>, vector<8x32xf32> -> vector<8x32xf32>
    %c0_67 = arith.constant 0 : index
    %c0_68 = arith.constant 0 : index
    %75 = vector.load %arg6[%c0_67, %c0_68] : memref<33x128xf32, #tpu.memory_space<vmem>>, vector<32x128xf32>
    %cst_69 = arith.constant dense<0.000000e+00> : vector<8x128xf32>
    %76 = tpu.matmul %74, %75, %cst_69 {dimension_numbers = #tpu.dot_dimension_numbers<[1], [0], [0], [1], [0, 0, 1, 1], [], []>} : vector<8x32xf32>, vector<32x128xf32>, vector<8x128xf32> -> vector<8x128xf32>
    %c32 = arith.constant 32 : index
    %c0_70 = arith.constant 0 : index
    %77 = vector.load %arg6[%c32, %c0_70] : memref<33x128xf32, #tpu.memory_space<vmem>>, vector<1x128xf32>
    %78 = vector.broadcast %77 : vector<1x128xf32> to vector<8x128xf32>
    %79 = arith.addf %76, %78 : vector<8x128xf32>
    %cst_71 = arith.constant 0.000000e+00 : f32
    %80 = vector.broadcast %cst_71 : f32 to vector<8x128xf32>
    %81 = arith.maximumf %79, %80 : vector<8x128xf32>
    %c0_72 = arith.constant 0 : index
    %c0_73 = arith.constant 0 : index
    %82 = vector.load %arg7[%c0_72, %c0_73] : memref<8x128xf32, #tpu.memory_space<vmem>>, vector<8x128xf32>
    tpu.vector_store %arg7[%c0_72, %c0_73], %81 {strides = array<i32>} : memref<8x128xf32, #tpu.memory_space<vmem>>, vector<8x128xf32>,
    return
  }
  func.func @transform_0(%arg0: i32) -> (i32, i32) {
    %c0_i32 = arith.constant 0 : i32
    %c0_i32_0 = arith.constant 0 : i32
    return %arg0, %c0_i32 : i32, i32
  }
  func.func @transform_1(%arg0: i32) -> (i32, i32) {
    %c0_i32 = arith.constant 0 : i32
    %c0_i32_0 = arith.constant 0 : i32
    %c0_i32_1 = arith.constant 0 : i32
    return %c0_i32, %c0_i32_0 : i32, i32
  }
  func.func @transform_2(%arg0: i32) -> (i32, i32) {
    %c0_i32 = arith.constant 0 : i32
    %c0_i32_0 = arith.constant 0 : i32
    %c0_i32_1 = arith.constant 0 : i32
    return %c0_i32, %c0_i32_0 : i32, i32
  }
  func.func @transform_3(%arg0: i32) -> (i32, i32, i32) {
    %c0_i32 = arith.constant 0 : i32
    %c0_i32_0 = arith.constant 0 : i32
    %c0_i32_1 = arith.constant 0 : i32
    %c0_i32_2 = arith.constant 0 : i32
    return %c0_i32, %c0_i32_0, %c0_i32_1 : i32, i32, i32
  }
  func.func @transform_4(%arg0: i32) -> (i32, i32, i32) {
    %c0_i32 = arith.constant 0 : i32
    %c0_i32_0 = arith.constant 0 : i32
    %c0_i32_1 = arith.constant 0 : i32
    %c0_i32_2 = arith.constant 0 : i32
    return %c0_i32, %c0_i32_0, %c0_i32_1 : i32, i32, i32
  }
  func.func @transform_5(%arg0: i32) -> (i32, i32) {
    %c0_i32 = arith.constant 0 : i32
    %c0_i32_0 = arith.constant 0 : i32
    %c0_i32_1 = arith.constant 0 : i32
    return %c0_i32, %c0_i32_0 : i32, i32
  }
  func.func @transform_6(%arg0: i32) -> (i32, i32) {
    %c0_i32 = arith.constant 0 : i32
    %c0_i32_0 = arith.constant 0 : i32
    return %arg0, %c0_i32 : i32, i32
  }
}

</mosaic_0001>

<llo_original>
// kernel: tpu_custom_call.1
$region0: #{tpu_custom_call.1}
  #allocation0 [shape = 'u32[]', space=smem, size = 0x4, offset = 0x4, fixed_abs, tag = 'smem constant byte address 0x4 - core index']
  #allocation1 [shape = 'u32[144,128]{1,0:T(1,128)}', space=vmem, size = 0x12000, scoped, tag = 'internal scratch']
  #allocation2 [shape = 'f32[256,32]{1,0:T(8,128)}', space=vmem, size = 0x20000, scoped, tag = 'scratch operand']
  %s0 = inlined_call_operand.vmem [shape: f32[256,32], index: 0, kind: input, shape index: {}]
  %s1 = inlined_call_operand.vmem [shape: f32[128,256], index: 1, kind: input, shape index: {}]
  %s2 = inlined_call_operand.vmem [shape: f32[8,128], index: 2, kind: input, shape index: {}]
  %s3 = inlined_call_operand.hbm [shape: f32[4,32,96], index: 3, kind: input, shape index: {}]
  %s4 = inlined_call_operand.vmem [shape: f32[4,1,32], index: 4, kind: input, shape index: {}]
  %s5 = inlined_call_operand.vmem [shape: f32[33,128], index: 5, kind: input, shape index: {}]
  %s6 = inlined_call_operand.hbm [shape: f32[16,128], index: 6, kind: output, shape index: {}]
  %s7 = sld [smem:[#allocation0]]
  $region61: #{tpu_custom_call.1} parent=0
    _
  %s9 = ssub.s32 1, %s7
  %s10 = scalar_select 0, %s9, %s7
  $region1: #{tpu_custom_call.1} parent=0
    #allocation3 [shape = 'u8[65536]{0}', space=vmem, size = 0x10000, scoped, tag = 'input window, operand 3, single buffered']
    #allocation4 [shape = 's32[2]{0}', space=sflag, size = 0x8, scoped, tag = 'scoped memory for tpu_custom_call.1']
    #allocation5 [shape = 's32[2]{0}', space=sflag, size = 0x8, scoped, tag = 'scoped memory for tpu_custom_call.1']
    #allocation6 [shape = 'u8[8192]{0}', space=vmem, size = 0x2000, scoped, tag = 'output window, operand 0']
    %11 = vsyncpa [#allocation4], 0
    %12 = vsyncpa [#allocation5], 0
    %s13 = scalar_lea.sflag [#allocation5], 1
    %14 = vsyncpa %s13, 0
    loop: start=0, step=1, limit=4
    $region2: #{tpu_custom_call.1} parent=1 // loop_pre_header
      _
    $region3: #{tpu_custom_call.1} parent=1 // loop_header
      %s16 = sphi 0, %s20
      %p17 = scmp.ge.s32.totalorder %s16, 4
      %s26 = sphi 0, %s28
      %s29 = sphi 0, %s26
      %s30 = sphi 0, %s29
      %s46 = sphi 0, %s30
      %s50 = sphi 0, %s50
      %s52 = sphi 0, %s50
      %s53 = sphi 0, %s52
      %s67 = sphi 0, %s53
      %s71 = sphi 0, %s71
      %s73 = sphi 0, %s71
      %s74 = sphi 0, %s73
      %s88 = sphi 0, %s74
      %s92 = sphi 0, %s92
      %s94 = sphi 0, %s92
      %s95 = sphi 0, %s94
      %s109 = sphi 0, %s95
      %s113 = sphi 0, %s113
      %s115 = sphi 0, %s113
      %s116 = sphi 0, %s115
      %s130 = sphi 0, %s116
      %s134 = sphi 0, %s134
      %s136 = sphi 0, %s134
      %s137 = sphi 0, %s136
      %s151 = sphi 0, %s137
      %s157 = sphi 0, %s159
      %s160 = sphi 0, %s157
      %s161 = sphi 0, %s160
      %s177 = sphi 0, %s161
    $region4: #{tpu_custom_call.1} parent=1 // loop_header_branch
      %19 = sbr.rel (%p17) target = $region8
    $region5: #{tpu_custom_call.1} parent=1 // loop_body
      %s21 = ssub.s32 %s16, 1
      %s22 = ssub.s32 %s16, 2
      %s23 = sadd.s32 %s16, 1
      %s24 = ssub.s32 %s16, %s23
      %p25 = scmp.eq.s32.totalorder %s24, 0
      %s27 = sadd.s32 %s26, 1
      %s28 = scalar_select %p25, %s26, %s27
      %p31 = pneg %p25
      %p32 = scmp.eq.s32.totalorder %s16, 1
      %p33 = por %p31, %p32
      %p34 = scmp.ne.s32.totalorder %s26, %s29
      %p35 = scmp.eq.s32.totalorder %s16, 0
      %p36 = por %p34, %p35
      %p37 = scmp.ne.s32.totalorder %s26, %s29
      %p38 = scmp.eq.s32.totalorder %s21, 1
      %p39 = por %p37, %p38
      %p40 = scmp.ne.s32.totalorder %s29, %s30
      %p41 = scmp.eq.s32.totalorder %s21, 0
      %p42 = por %p40, %p41
      %p43 = scmp.ne.s32.totalorder %s29, %s30
      %p44 = scmp.eq.s32.totalorder %s22, 1
      %p45 = por %p43, %p44
      %p47 = scmp.ne.s32.totalorder %s30, %s46
      %p48 = scmp.eq.s32.totalorder %s22, 0
      %p49 = por %p47, %p48
      %s51 = sadd.s32 %s50, 1
      %p54 = scmp.eq.s32.totalorder %s16, 1
      %p55 = scmp.ne.s32.totalorder %s50, %s52
      %p56 = scmp.eq.s32.totalorder %s16, 0
      %p57 = por %p55, %p56
      %p58 = scmp.ne.s32.totalorder %s50, %s52
      %p59 = scmp.eq.s32.totalorder %s21, 1
      %p60 = por %p58, %p59
      %p61 = scmp.ne.s32.totalorder %s52, %s53
      %p62 = scmp.eq.s32.totalorder %s21, 0
      %p63 = por %p61, %p62
      %p64 = scmp.ne.s32.totalorder %s52, %s53
      %p65 = scmp.eq.s32.totalorder %s22, 1
      %p66 = por %p64, %p65
      %p68 = scmp.ne.s32.totalorder %s53, %s67
      %p69 = scmp.eq.s32.totalorder %s22, 0
      %p70 = por %p68, %p69
      %s72 = sadd.s32 %s71, 1
      %p75 = scmp.eq.s32.totalorder %s16, 1
      %p76 = scmp.ne.s32.totalorder %s71, %s73
      %p77 = scmp.eq.s32.totalorder %s16, 0
      %p78 = por %p76, %p77
      %p79 = scmp.ne.s32.totalorder %s71, %s73
      %p80 = scmp.eq.s32.totalorder %s21, 1
      %p81 = por %p79, %p80
      %p82 = scmp.ne.s32.totalorder %s73, %s74
      %p83 = scmp.eq.s32.totalorder %s21, 0
      %p84 = por %p82, %p83
      %p85 = scmp.ne.s32.totalorder %s73, %s74
      %p86 = scmp.eq.s32.totalorder %s22, 1
      %p87 = por %p85, %p86
      %p89 = scmp.ne.s32.totalorder %s74, %s88
      %p90 = scmp.eq.s32.totalorder %s22, 0
      %p91 = por %p89, %p90
      %s93 = sadd.s32 %s92, 1
      %p96 = scmp.eq.s32.totalorder %s16, 1
      %p97 = scmp.ne.s32.totalorder %s92, %s94
      %p98 = scmp.eq.s32.totalorder %s16, 0
      %p99 = por %p97, %p98
      %p100 = scmp.ne.s32.totalorder %s92, %s94
      %p101 = scmp.eq.s32.totalorder %s21, 1
      %p102 = por %p100, %p101
      %p103 = scmp.ne.s32.totalorder %s94, %s95
      %p104 = scmp.eq.s32.totalorder %s21, 0
      %p105 = por %p103, %p104
      %p106 = scmp.ne.s32.totalorder %s94, %s95
      %p107 = scmp.eq.s32.totalorder %s22, 1
      %p108 = por %p106, %p107
      %p110 = scmp.ne.s32.totalorder %s95, %s109
      %p111 = scmp.eq.s32.totalorder %s22, 0
      %p112 = por %p110, %p111
      %s114 = sadd.s32 %s113, 1
      %p117 = scmp.eq.s32.totalorder %s16, 1
      %p118 = scmp.ne.s32.totalorder %s113, %s115
      %p119 = scmp.eq.s32.totalorder %s16, 0
      %p120 = por %p118, %p119
      %p121 = scmp.ne.s32.totalorder %s113, %s115
      %p122 = scmp.eq.s32.totalorder %s21, 1
      %p123 = por %p121, %p122
      %p124 = scmp.ne.s32.totalorder %s115, %s116
      %p125 = scmp.eq.s32.totalorder %s21, 0
      %p126 = por %p124, %p125
      %p127 = scmp.ne.s32.totalorder %s115, %s116
      %p128 = scmp.eq.s32.totalorder %s22, 1
      %p129 = por %p127, %p128
      %p131 = scmp.ne.s32.totalorder %s116, %s130
      %p132 = scmp.eq.s32.totalorder %s22, 0
      %p133 = por %p131, %p132
      %s135 = sadd.s32 %s134, 1
      %p138 = scmp.eq.s32.totalorder %s16, 1
      %p139 = scmp.ne.s32.totalorder %s134, %s136
      %p140 = scmp.eq.s32.totalorder %s16, 0
      %p141 = por %p139, %p140
      %p142 = scmp.ne.s32.totalorder %s134, %s136
      %p143 = scmp.eq.s32.totalorder %s21, 1
      %p144 = por %p142, %p143
      %p145 = scmp.ne.s32.totalorder %s136, %s137
      %p146 = scmp.eq.s32.totalorder %s21, 0
      %p147 = por %p145, %p146
      %p148 = scmp.ne.s32.totalorder %s136, %s137
      %p149 = scmp.eq.s32.totalorder %s22, 1
      %p150 = por %p148, %p149
      %p152 = scmp.ne.s32.totalorder %s137, %s151
      %p153 = scmp.eq.s32.totalorder %s22, 0
      %p154 = por %p152, %p153
      %s155 = ssub.s32 %s16, %s23
      %p156 = scmp.eq.s32.totalorder %s155, 0
      %s158 = sadd.s32 %s157, 1
      %s159 = scalar_select %p156, %s157, %s158
      %p162 = pneg %p156
      %p163 = scmp.eq.s32.totalorder %s16, 1
      %p164 = por %p162, %p163
      %p165 = scmp.ne.s32.totalorder %s157, %s160
      %p166 = scmp.eq.s32.totalorder %s16, 0
      %p167 = por %p165, %p166
      %p168 = scmp.ne.s32.totalorder %s157, %s160
      %p169 = scmp.eq.s32.totalorder %s21, 1
      %p170 = por %p168, %p169
      %p171 = scmp.ne.s32.totalorder %s160, %s161
      %p172 = scmp.eq.s32.totalorder %s21, 0
      %p173 = por %p171, %p172
      %p174 = scmp.ne.s32.totalorder %s160, %s161
      %p175 = scmp.eq.s32.totalorder %s22, 1
      %p176 = por %p174, %p175
      %p178 = scmp.ne.s32.totalorder %s161, %s177
      %p179 = scmp.eq.s32.totalorder %s22, 0
      %p180 = por %p178, %p179
      %p181 = scmp.le.s32.totalorder 1, %s16
      %p182 = scmp.lt.s32.totalorder %s16, 3
      %p183 = pnand %p181, %p182
      %p184 = pneg %p183
      // Predicated region
      $region9: #{tpu_custom_call.1} parent=5 // pred_check
        _
      $region10: #{tpu_custom_call.1} parent=5 // pred_check_branch
        %186 = sbr.rel (%p183) target = $region12
      $region11: #{tpu_custom_call.1} parent=5 // pred_region
        %s187 = ssub.s32 %s16, 1
        // Predicated region
        $region13: #{tpu_custom_call.1} parent=11 // pred_check
          %p188 = pneg %p63
        $region14: #{tpu_custom_call.1} parent=11 // pred_check_branch
          %190 = sbr.rel (%p188) target = $region16
        $region15: #{tpu_custom_call.1} parent=11 // pred_region
          _
        $region16: #{tpu_custom_call.1} parent=11 // pred_fallthru
          _
        // Predicated region
        $region17: #{tpu_custom_call.1} parent=11 // pred_check
          %p191 = pneg %p84
        $region18: #{tpu_custom_call.1} parent=11 // pred_check_branch
          %193 = sbr.rel (%p191) target = $region20
        $region19: #{tpu_custom_call.1} parent=11 // pred_region
          _
        $region20: #{tpu_custom_call.1} parent=11 // pred_fallthru
          _
        // Predicated region
        $region21: #{tpu_custom_call.1} parent=11 // pred_check
          %p194 = pneg %p105
        $region22: #{tpu_custom_call.1} parent=11 // pred_check_branch
          %196 = sbr.rel (%p194) target = $region24
        $region23: #{tpu_custom_call.1} parent=11 // pred_region
          %s198 = ssub.s32 2048, 2048
          %199 = vsyncadd [#allocation4], %s198
          %s200 = sshll.u32 [#allocation3], 4
          %s201 = int_to_ptr.vmem [resolvable:$true] %s200
          %206 = dma.hbm_to_vmem [thread:$0]  %s3, 2048, %s201, [#allocation4], 128, 128, 8
        $region24: #{tpu_custom_call.1} parent=11 // pred_fallthru
          _
        // Predicated region
        $region25: #{tpu_custom_call.1} parent=11 // pred_check
          %p207 = pneg %p126
        $region26: #{tpu_custom_call.1} parent=11 // pred_check_branch
          %209 = sbr.rel (%p207) target = $region28
        $region27: #{tpu_custom_call.1} parent=11 // pred_region
          _
        $region28: #{tpu_custom_call.1} parent=11 // pred_fallthru
          _
        // Predicated region
        $region29: #{tpu_custom_call.1} parent=11 // pred_check
          %p210 = pneg %p147
        $region30: #{tpu_custom_call.1} parent=11 // pred_check_branch
          %212 = sbr.rel (%p210) target = $region32
        $region31: #{tpu_custom_call.1} parent=11 // pred_region
          _
        $region32: #{tpu_custom_call.1} parent=11 // pred_fallthru
          _
      $region12: #{tpu_custom_call.1} parent=5 // pred_fallthru
        _
      %p213 = scmp.lt.s32.totalorder %s16, 2
      // Predicated region
      $region33: #{tpu_custom_call.1} parent=5 // pred_check
        %p214 = pneg %p213
      $region34: #{tpu_custom_call.1} parent=5 // pred_check_branch
        %216 = sbr.rel (%p214) target = $region36
      $region35: #{tpu_custom_call.1} parent=5 // pred_region
        // Predicated region
        $region37: #{tpu_custom_call.1} parent=35 // pred_check
          %p217 = pneg %p36
        $region38: #{tpu_custom_call.1} parent=35 // pred_check_branch
          %219 = sbr.rel (%p217) target = $region40
        $region39: #{tpu_custom_call.1} parent=35 // pred_region
          %s220 = smul.u32 16, %s16
          %p221 = scmp.lt.s32.totalorder %s220, 31
          %s222 = scalar_select %p221, %s220, 31
          %s223 = smul.addr %s222, 8
          %s224 = scalar_lea.vmem %s0, %s223
          %s225 = smul.u32 16, %s16
        $region40: #{tpu_custom_call.1} parent=35 // pred_fallthru
          _
      $region36: #{tpu_custom_call.1} parent=5 // pred_fallthru
        _
      %p226 = scmp.le.s32.totalorder 1, %s16
      %p227 = scmp.lt.s32.totalorder %s16, 3
      %p228 = pnand %p226, %p227
      %p229 = pneg %p228
      // Predicated region
      $region41: #{tpu_custom_call.1} parent=5 // pred_check
        _
      $region42: #{tpu_custom_call.1} parent=5 // pred_check_branch
        %231 = sbr.rel (%p228) target = $region44
      $region43: #{tpu_custom_call.1} parent=5 // pred_region
        %s232 = ssub.s32 %s16, 1
        // Predicated region
        $region45: #{tpu_custom_call.1} parent=43 // pred_check
          %p233 = pneg %p105
        $region46: #{tpu_custom_call.1} parent=43 // pred_check_branch
          %235 = sbr.rel (%p233) target = $region48
        $region47: #{tpu_custom_call.1} parent=43 // pred_region
          %236 = dma.done [#allocation4], 2048
        $region48: #{tpu_custom_call.1} parent=43 // pred_fallthru
          _
        %s237 = smul.u32 16, %s21
        %p238 = scmp.lt.s32.totalorder %s237, 31
        %s239 = scalar_select %p238, %s237, 31
        %s240 = smul.addr %s239, 8
        %s241 = scalar_lea.vmem %s0, %s240
        %p242 = pneg %p42
        %p243 = pneg %p39
        %p244 = pneg %p63
        %p245 = pneg %p60
        %p246 = pneg %p84
        %p247 = pneg %p81
        %p248 = pneg %p105
        %p249 = pneg %p102
        %p250 = pneg %p126
        %p251 = pneg %p123
        %p252 = pneg %p147
        %p253 = pneg %p144
        %p254 = pneg %p173
        %p255 = pneg %p170
        %s256 = sand.u32 %s160, 1
        %s257 = scalar_lea.sflag [#allocation5], %s256
        %s258 = sand.u32 %s160, 1
        %s259 = smul.addr %s258, 8
        %s260 = scalar_lea.vmem [#allocation6], %s259
        %s261 = smul.u32 16, %s21
        %p262 = scmp.lt.s32.totalorder %s261, 31
        %s263 = scalar_select %p262, %s261, 31
        %s264 = smul.addr %s263, 8
        %s265 = scalar_lea.vmem %s0, %s264
        %s266 = smul.u32 16, %s21
        %v267 = vld [vmem:[%s265] sm:$0xff]
        %v268 = vld [vmem:[%s265 + $0x8] sm:$0xff]
        %v269 = vld [vmem:[%s265 + $0x10] sm:$0xff]
        %v270 = vld [vmem:[%s265 + $0x18] sm:$0xff]
        %v271 = vld [vmem:[%s265 + $0x20] sm:$0xff]
        %v272 = vld [vmem:[%s265 + $0x28] sm:$0xff]
        %v273 = vld [vmem:[%s265 + $0x30] sm:$0xff]
        %v274 = vld [vmem:[%s265 + $0x38] sm:$0xff]
        %v275 = vld [vmem:[%s265 + $0x40] sm:$0xff]
        %v276 = vld [vmem:[%s265 + $0x48] sm:$0xff]
        %v277 = vld [vmem:[%s265 + $0x50] sm:$0xff]
        %v278 = vld [vmem:[%s265 + $0x58] sm:$0xff]
        %v279 = vld [vmem:[%s265 + $0x60] sm:$0xff]
        %v280 = vld [vmem:[%s265 + $0x68] sm:$0xff]
        %v281 = vld [vmem:[%s265 + $0x70] sm:$0xff]
        %v282 = vld [vmem:[%s265 + $0x78] sm:$0xff]
        %v283 = vld [vmem:[#allocation3] sm:$0xff]
        %v284 = vld [vmem:[#allocation3 + $0x8] sm:$0xff]
        %v285 = vld [vmem:[#allocation3 + $0x10] sm:$0xff]
        %v286 = vld [vmem:[#allocation3 + $0x18] sm:$0xff]
        %vm287 = vcmask 261120
        %v289 = vsel %vm287, %v267, 0
        %v292 = vsel %vm287, %v268, 0
        %v295 = vsel %vm287, %v269, 0
        %v298 = vsel %vm287, %v270, 0
        %v301 = vsel %vm287, %v271, 0
        %v304 = vsel %vm287, %v272, 0
        %v307 = vsel %vm287, %v273, 0
        %v310 = vsel %vm287, %v274, 0
        %v313 = vsel %vm287, %v275, 0
        %v316 = vsel %vm287, %v276, 0
        %v319 = vsel %vm287, %v277, 0
        %v322 = vsel %vm287, %v278, 0
        %v325 = vsel %vm287, %v279, 0
        %v328 = vsel %vm287, %v280, 0
        %v331 = vsel %vm287, %v281, 0
        %v334 = vsel %vm287, %v282, 0
        %336 = vmatprep.subr.mxu0 0.0
        %337 = vmatpush1.msra.mxu0 %v283
        %338 = vmatprep.subr.mxu0 0.0
        %339 = vmatpush1.msra.mxu0 %v284
        %340 = vmatprep.subr.mxu0 0.0
        %341 = vmatpush1.msra.mxu0 %v285
        %342 = vmatprep.subr.mxu0 0.0
        %343 = vmatpush1.msra.mxu0 %v286
        %344 = vmatprep.subr.mxu0 0.0
        %345 = vmatpush1.msra.mxu0 0.0
        %346 = vmatprep.subr.mxu0 0.0
        %347 = vmatpush1.msra.mxu0 0.0
        %348 = vmatprep.subr.mxu0 0.0
        %349 = vmatpush1.msra.mxu0 0.0
        %350 = vmatprep.subr.mxu0 0.0
        %351 = vmatpush1.msra.mxu0 0.0
        %352 = vmatprep.subr.mxu0 0.0
        %353 = vmatpush1.msra.mxu0 0.0
        %354 = vmatprep.subr.mxu0 0.0
        %355 = vmatpush1.msra.mxu0 0.0
        %356 = vmatprep.subr.mxu0 0.0
        %357 = vmatpush1.msra.mxu0 0.0
        %358 = vmatprep.subr.mxu0 0.0
        %359 = vmatpush1.msra.mxu0 0.0
        %360 = vmatprep.subr.mxu0 0.0
        %361 = vmatpush1.msra.mxu0 0.0
        %362 = vmatprep.subr.mxu0 0.0
        %363 = vmatpush1.msra.mxu0 0.0
        %364 = vmatprep.subr.mxu0 0.0
        %365 = vmatpush1.msra.mxu0 0.0
        %366 = vmatprep.subr.mxu0 0.0
        %367 = vmatpush1.msra.mxu0 0.0
        %368 = vmatprep.subr.mxu0 0.0
        %369 = vmatpush1.msra.mxu0 0.0
        %370 = vmatprep.subr.mxu0 0.0
        %371 = vmatpush1.msra.mxu0 0.0
        %372 = vmatprep.subr.mxu0 0.0
        %373 = vmatpush1.msra.mxu0 0.0
        %374 = vmatprep.subr.mxu0 0.0
        %375 = vmatpush1.msra.mxu0 0.0
        %376 = vmatprep.subr.mxu0 0.0
        %377 = vmatpush1.msra.mxu0 0.0
        %378 = vmatprep.subr.mxu0 0.0
        %379 = vmatpush1.msra.mxu0 0.0
        %380 = vmatprep.subr.mxu0 0.0
        %381 = vmatpush1.msra.mxu0 0.0
        %382 = vmatprep.subr.mxu0 0.0
        %383 = vmatpush1.msra.mxu0 0.0
        %384 = vmatprep.subr.mxu0 0.0
        %385 = vmatpush1.msra.mxu0 0.0
        %386 = vmatprep.subr.mxu0 0.0
        %387 = vmatpush1.msra.mxu0 0.0
        %388 = vmatprep.subr.mxu0 0.0
        %389 = vmatpush1.msra.mxu0 0.0
        %390 = vmatprep.subr.mxu0 0.0
        %391 = vmatpush1.msra.mxu0 0.0
        %392 = vmatprep.subr.mxu0 0.0
        %393 = vmatpush1.msra.mxu0 0.0
        %394 = vmatprep.subr.mxu0 0.0
        %395 = vmatpush1.msra.mxu0 0.0
        %396 = vmatprep.subr.mxu0 0.0
        %397 = vmatpush1.msra.mxu0 0.0
        %398 = vmatprep.subr.mxu0 0.0
        %399 = vmatpush1.msra.mxu0 0.0
        %400 = vmatprep.mubr.f32.mxu0 0.0
        %401 = vmatmul.mubr.f32.gmra.mrb[0].mxu0 %v289
        %v402 = vpop.f32.mrb[0].mxu0
        %v403 = vadd.f32 0.0, %v402
        %v404 = vpop.f32.mrb[0].mxu0
        %405 = vmatprep.mubr.f32.mxu0 0.0
        %406 = vmatmul.mubr.f32.gmra.mrb[0].mxu0 %v292
        %v407 = vpop.f32.mrb[0].mxu0
        %v408 = vadd.f32 0.0, %v407
        %v409 = vpop.f32.mrb[0].mxu0
        %410 = vmatprep.mubr.f32.mxu0 0.0
        %411 = vmatmul.mubr.f32.gmra.mrb[0].mxu0 %v295
        %v412 = vpop.f32.mrb[0].mxu0
        %v413 = vadd.f32 0.0, %v412
        %v414 = vpop.f32.mrb[0].mxu0
        %415 = vmatprep.mubr.f32.mxu0 0.0
        %416 = vmatmul.mubr.f32.gmra.mrb[0].mxu0 %v298
        %v417 = vpop.f32.mrb[0].mxu0
        %v418 = vadd.f32 0.0, %v417
        %v419 = vpop.f32.mrb[0].mxu0
        %420 = vmatprep.mubr.f32.mxu0 0.0
        %421 = vmatmul.mubr.f32.gmra.mrb[0].mxu0 %v301
        %v422 = vpop.f32.mrb[0].mxu0
        %v423 = vadd.f32 0.0, %v422
        %v424 = vpop.f32.mrb[0].mxu0
        %425 = vmatprep.mubr.f32.mxu0 0.0
        %426 = vmatmul.mubr.f32.gmra.mrb[0].mxu0 %v304
        %v427 = vpop.f32.mrb[0].mxu0
        %v428 = vadd.f32 0.0, %v427
        %v429 = vpop.f32.mrb[0].mxu0
        %430 = vmatprep.mubr.f32.mxu0 0.0
        %431 = vmatmul.mubr.f32.gmra.mrb[0].mxu0 %v307
        %v432 = vpop.f32.mrb[0].mxu0
        %v433 = vadd.f32 0.0, %v432
        %v434 = vpop.f32.mrb[0].mxu0
        %435 = vmatprep.mubr.f32.mxu0 0.0
        %436 = vmatmul.mubr.f32.gmra.mrb[0].mxu0 %v310
        %v437 = vpop.f32.mrb[0].mxu0
        %v438 = vadd.f32 0.0, %v437
        %v439 = vpop.f32.mrb[0].mxu0
        %440 = vmatprep.mubr.f32.mxu0 0.0
        %441 = vmatmul.mubr.f32.gmra.mrb[0].mxu0 %v313
        %v442 = vpop.f32.mrb[0].mxu0
        %v443 = vadd.f32 0.0, %v442
        %v444 = vpop.f32.mrb[0].mxu0
        %445 = vmatprep.mubr.f32.mxu0 0.0
        %446 = vmatmul.mubr.f32.gmra.mrb[0].mxu0 %v316
        %v447 = vpop.f32.mrb[0].mxu0
        %v448 = vadd.f32 0.0, %v447
        %v449 = vpop.f32.mrb[0].mxu0
        %450 = vmatprep.mubr.f32.mxu0 0.0
        %451 = vmatmul.mubr.f32.gmra.mrb[0].mxu0 %v319
        %v452 = vpop.f32.mrb[0].mxu0
        %v453 = vadd.f32 0.0, %v452
        %v454 = vpop.f32.mrb[0].mxu0
        %455 = vmatprep.mubr.f32.mxu0 0.0
        %456 = vmatmul.mubr.f32.gmra.mrb[0].mxu0 %v322
        %v457 = vpop.f32.mrb[0].mxu0
        %v458 = vadd.f32 0.0, %v457
        %v459 = vpop.f32.mrb[0].mxu0
        %460 = vmatprep.mubr.f32.mxu0 0.0
        %461 = vmatmul.mubr.f32.gmra.mrb[0].mxu0 %v325
        %v462 = vpop.f32.mrb[0].mxu0
        %v463 = vadd.f32 0.0, %v462
        %v464 = vpop.f32.mrb[0].mxu0
        %465 = vmatprep.mubr.f32.mxu0 0.0
        %466 = vmatmul.mubr.f32.gmra.mrb[0].mxu0 %v328
        %v467 = vpop.f32.mrb[0].mxu0
        %v468 = vadd.f32 0.0, %v467
        %v469 = vpop.f32.mrb[0].mxu0
        %470 = vmatprep.mubr.f32.mxu0 0.0
        %471 = vmatmul.mubr.f32.gmra.mrb[0].mxu0 %v331
        %v472 = vpop.f32.mrb[0].mxu0
        %v473 = vadd.f32 0.0, %v472
        %v474 = vpop.f32.mrb[0].mxu0
        %475 = vmatprep.mubr.f32.mxu0 0.0
        %476 = vmatmul.mubr.f32.gmra.mrb[0].mxu0 %v334
        %v477 = vpop.f32.mrb[0].mxu0
        %v478 = vadd.f32 0.0, %v477
        %v479 = vpop.f32.mrb[0].mxu0
        %480 = vdwg.mxu0
        %481 = vst.msk [vmem:[#allocation2] sm:$0xff] %vm287, %v403
        %482 = vst.msk [vmem:[#allocation2 + $0x8] sm:$0xff] %vm287, %v408
        %483 = vst.msk [vmem:[#allocation2 + $0x10] sm:$0xff] %vm287, %v413
        %484 = vst.msk [vmem:[#allocation2 + $0x18] sm:$0xff] %vm287, %v418
        %485 = vst.msk [vmem:[#allocation2 + $0x20] sm:$0xff] %vm287, %v423
        %486 = vst.msk [vmem:[#allocation2 + $0x28] sm:$0xff] %vm287, %v428
        %487 = vst.msk [vmem:[#allocation2 + $0x30] sm:$0xff] %vm287, %v433
        %488 = vst.msk [vmem:[#allocation2 + $0x38] sm:$0xff] %vm287, %v438
        %489 = vst.msk [vmem:[#allocation2 + $0x40] sm:$0xff] %vm287, %v443
        %490 = vst.msk [vmem:[#allocation2 + $0x48] sm:$0xff] %vm287, %v448
        %491 = vst.msk [vmem:[#allocation2 + $0x50] sm:$0xff] %vm287, %v453
        %492 = vst.msk [vmem:[#allocation2 + $0x58] sm:$0xff] %vm287, %v458
        %493 = vst.msk [vmem:[#allocation2 + $0x60] sm:$0xff] %vm287, %v463
        %494 = vst.msk [vmem:[#allocation2 + $0x68] sm:$0xff] %vm287, %v468
        %495 = vst.msk [vmem:[#allocation2 + $0x70] sm:$0xff] %vm287, %v473
        %496 = vst.msk [vmem:[#allocation2 + $0x78] sm:$0xff] %vm287, %v478
        %513 = vrot.lane.b32.xlu0 %v403, 96
        %v514 = vpop.permute.xlu0 %513
        %515 = vrot.lane.b32.xlu0 %v408, 96
        %v516 = vpop.permute.xlu0 %515
        %517 = vrot.lane.b32.xlu0 %v413, 96
        %v518 = vpop.permute.xlu0 %517
        %519 = vrot.lane.b32.xlu0 %v418, 96
        %v520 = vpop.permute.xlu0 %519
        %521 = vrot.lane.b32.xlu0 %v423, 96
        %v522 = vpop.permute.xlu0 %521
        %523 = vrot.lane.b32.xlu0 %v428, 96
        %v524 = vpop.permute.xlu0 %523
        %525 = vrot.lane.b32.xlu0 %v433, 96
        %v526 = vpop.permute.xlu0 %525
        %527 = vrot.lane.b32.xlu0 %v438, 96
        %v528 = vpop.permute.xlu0 %527
        %529 = vrot.lane.b32.xlu0 %v443, 96
        %v530 = vpop.permute.xlu0 %529
        %531 = vrot.lane.b32.xlu0 %v448, 96
        %v532 = vpop.permute.xlu0 %531
        %533 = vrot.lane.b32.xlu0 %v453, 96
        %v534 = vpop.permute.xlu0 %533
        %535 = vrot.lane.b32.xlu0 %v458, 96
        %v536 = vpop.permute.xlu0 %535
        %537 = vrot.lane.b32.xlu0 %v463, 96
        %v538 = vpop.permute.xlu0 %537
        %539 = vrot.lane.b32.xlu0 %v468, 96
        %v540 = vpop.permute.xlu0 %539
        %541 = vrot.lane.b32.xlu0 %v473, 96
        %v542 = vpop.permute.xlu0 %541
        %543 = vrot.lane.b32.xlu0 %v478, 96
        %v544 = vpop.permute.xlu0 %543
        %561 = vst.msk [vmem:[#allocation2 + $0x80] sm:$0xff] %vm287, %v514
        %562 = vst.msk [vmem:[#allocation2 + $0x88] sm:$0xff] %vm287, %v516
        %563 = vst.msk [vmem:[#allocation2 + $0x90] sm:$0xff] %vm287, %v518
        %564 = vst.msk [vmem:[#allocation2 + $0x98] sm:$0xff] %vm287, %v520
        %565 = vst.msk [vmem:[#allocation2 + $0xa0] sm:$0xff] %vm287, %v522
        %566 = vst.msk [vmem:[#allocation2 + $0xa8] sm:$0xff] %vm287, %v524
        %567 = vst.msk [vmem:[#allocation2 + $0xb0] sm:$0xff] %vm287, %v526
        %568 = vst.msk [vmem:[#allocation2 + $0xb8] sm:$0xff] %vm287, %v528
        %569 = vst.msk [vmem:[#allocation2 + $0xc0] sm:$0xff] %vm287, %v530
        %570 = vst.msk [vmem:[#allocation2 + $0xc8] sm:$0xff] %vm287, %v532
        %571 = vst.msk [vmem:[#allocation2 + $0xd0] sm:$0xff] %vm287, %v534
        %572 = vst.msk [vmem:[#allocation2 + $0xd8] sm:$0xff] %vm287, %v536
        %573 = vst.msk [vmem:[#allocation2 + $0xe0] sm:$0xff] %vm287, %v538
        %574 = vst.msk [vmem:[#allocation2 + $0xe8] sm:$0xff] %vm287, %v540
        %575 = vst.msk [vmem:[#allocation2 + $0xf0] sm:$0xff] %vm287, %v542
        %576 = vst.msk [vmem:[#allocation2 + $0xf8] sm:$0xff] %vm287, %v544
        %v577 = vld [vmem:[%s1] sm:$0xff]
        %v578 = vld [vmem:[%s1 + $0x8] sm:$0xff]
        %v579 = vld [vmem:[%s1 + $0x10] sm:$0xff]
        %v580 = vld [vmem:[%s1 + $0x18] sm:$0xff]
        %v581 = vld [vmem:[%s1 + $0x20] sm:$0xff]
        %v582 = vld [vmem:[%s1 + $0x28] sm:$0xff]
        %v583 = vld [vmem:[%s1 + $0x30] sm:$0xff]
        %v584 = vld [vmem:[%s1 + $0x38] sm:$0xff]
        %v585 = vld [vmem:[%s1 + $0x40] sm:$0xff]
        %v586 = vld [vmem:[%s1 + $0x48] sm:$0xff]
        %v587 = vld [vmem:[%s1 + $0x50] sm:$0xff]
        %v588 = vld [vmem:[%s1 + $0x58] sm:$0xff]
        %v589 = vld [vmem:[%s1 + $0x60] sm:$0xff]
        %v590 = vld [vmem:[%s1 + $0x68] sm:$0xff]
        %v591 = vld [vmem:[%s1 + $0x70] sm:$0xff]
        %v592 = vld [vmem:[%s1 + $0x78] sm:$0xff]
        %v593 = vld [vmem:[%s1 + $0x80] sm:$0xff]
        %v594 = vld [vmem:[%s1 + $0x88] sm:$0xff]
        %v595 = vld [vmem:[%s1 + $0x90] sm:$0xff]
        %v596 = vld [vmem:[%s1 + $0x98] sm:$0xff]
        %v597 = vld [vmem:[%s1 + $0xa0] sm:$0xff]
        %v598 = vld [vmem:[%s1 + $0xa8] sm:$0xff]
        %v599 = vld [vmem:[%s1 + $0xb0] sm:$0xff]
        %v600 = vld [vmem:[%s1 + $0xb8] sm:$0xff]
        %v601 = vld [vmem:[%s1 + $0xc0] sm:$0xff]
        %v602 = vld [vmem:[%s1 + $0xc8] sm:$0xff]
        %v603 = vld [vmem:[%s1 + $0xd0] sm:$0xff]
        %v604 = vld [vmem:[%s1 + $0xd8] sm:$0xff]
        %v605 = vld [vmem:[%s1 + $0xe0] sm:$0xff]
        %v606 = vld [vmem:[%s1 + $0xe8] sm:$0xff]
        %v607 = vld [vmem:[%s1 + $0xf0] sm:$0xff]
        %v608 = vld [vmem:[%s1 + $0xf8] sm:$0xff]
        %v609 = vld [vmem:[#allocation2] sm:$0xff]
        %v610 = vld [vmem:[#allocation2 + $0x8] sm:$0xff]
        %v611 = vld [vmem:[#allocation2 + $0x10] sm:$0xff]
        %v612 = vld [vmem:[#allocation2 + $0x18] sm:$0xff]
        %v613 = vld [vmem:[#allocation2 + $0x20] sm:$0xff]
        %v614 = vld [vmem:[#allocation2 + $0x28] sm:$0xff]
        %v615 = vld [vmem:[#allocation2 + $0x30] sm:$0xff]
        %v616 = vld [vmem:[#allocation2 + $0x38] sm:$0xff]
        %v617 = vld [vmem:[#allocation2 + $0x40] sm:$0xff]
        %v618 = vld [vmem:[#allocation2 + $0x48] sm:$0xff]
        %v619 = vld [vmem:[#allocation2 + $0x50] sm:$0xff]
        %v620 = vld [vmem:[#allocation2 + $0x58] sm:$0xff]
        %v621 = vld [vmem:[#allocation2 + $0x60] sm:$0xff]
        %v622 = vld [vmem:[#allocation2 + $0x68] sm:$0xff]
        %v623 = vld [vmem:[#allocation2 + $0x70] sm:$0xff]
        %v624 = vld [vmem:[#allocation2 + $0x78] sm:$0xff]
        %v625 = vld [vmem:[#allocation2 + $0x80] sm:$0xff]
        %v626 = vld [vmem:[#allocation2 + $0x88] sm:$0xff]
        %v627 = vld [vmem:[#allocation2 + $0x90] sm:$0xff]
        %v628 = vld [vmem:[#allocation2 + $0x98] sm:$0xff]
        %v629 = vld [vmem:[#allocation2 + $0xa0] sm:$0xff]
        %v630 = vld [vmem:[#allocation2 + $0xa8] sm:$0xff]
        %v631 = vld [vmem:[#allocation2 + $0xb0] sm:$0xff]
        %v632 = vld [vmem:[#allocation2 + $0xb8] sm:$0xff]
        %v633 = vld [vmem:[#allocation2 + $0xc0] sm:$0xff]
        %v634 = vld [vmem:[#allocation2 + $0xc8] sm:$0xff]
        %v635 = vld [vmem:[#allocation2 + $0xd0] sm:$0xff]
        %v636 = vld [vmem:[#allocation2 + $0xd8] sm:$0xff]
        %v637 = vld [vmem:[#allocation2 + $0xe0] sm:$0xff]
        %v638 = vld [vmem:[#allocation2 + $0xe8] sm:$0xff]
        %v639 = vld [vmem:[#allocation2 + $0xf0] sm:$0xff]
        %v640 = vld [vmem:[#allocation2 + $0xf8] sm:$0xff]
        %641 = vrot.lane.b32.xlu0 %v403, 64
        %v642 = vpop.permute.xlu0 %641
        %643 = vrot.lane.b32.xlu0 %v408, 64
        %v644 = vpop.permute.xlu0 %643
        %645 = vrot.lane.b32.xlu0 %v413, 64
        %v646 = vpop.permute.xlu0 %645
        %647 = vrot.lane.b32.xlu0 %v418, 64
        %v648 = vpop.permute.xlu0 %647
        %649 = vrot.lane.b32.xlu0 %v423, 64
        %v650 = vpop.permute.xlu0 %649
        %651 = vrot.lane.b32.xlu0 %v428, 64
        %v652 = vpop.permute.xlu0 %651
        %653 = vrot.lane.b32.xlu0 %v433, 64
        %v654 = vpop.permute.xlu0 %653
        %655 = vrot.lane.b32.xlu0 %v438, 64
        %v656 = vpop.permute.xlu0 %655
        %657 = vrot.lane.b32.xlu0 %v443, 64
        %v658 = vpop.permute.xlu0 %657
        %659 = vrot.lane.b32.xlu0 %v448, 64
        %v660 = vpop.permute.xlu0 %659
        %661 = vrot.lane.b32.xlu0 %v453, 64
        %v662 = vpop.permute.xlu0 %661
        %663 = vrot.lane.b32.xlu0 %v458, 64
        %v664 = vpop.permute.xlu0 %663
        %665 = vrot.lane.b32.xlu0 %v463, 64
        %v666 = vpop.permute.xlu0 %665
        %667 = vrot.lane.b32.xlu0 %v468, 64
        %v668 = vpop.permute.xlu0 %667
        %669 = vrot.lane.b32.xlu0 %v473, 64
        %v670 = vpop.permute.xlu0 %669
        %671 = vrot.lane.b32.xlu0 %v478, 64
        %v672 = vpop.permute.xlu0 %671
        %689 = vmatprep.subr.mxu0 0.0
        %690 = vmatpush1.msra.mxu0 %v609
        %691 = vmatprep.subr.mxu0 0.0
        %692 = vmatpush1.msra.mxu0 %v610
        %693 = vmatprep.subr.mxu0 0.0
        %694 = vmatpush1.msra.mxu0 %v611
        %695 = vmatprep.subr.mxu0 0.0
        %696 = vmatpush1.msra.mxu0 %v612
        %697 = vmatprep.subr.mxu0 0.0
        %698 = vmatpush1.msra.mxu0 %v613
        %699 = vmatprep.subr.mxu0 0.0
        %700 = vmatpush1.msra.mxu0 %v614
        %701 = vmatprep.subr.mxu0 0.0
        %702 = vmatpush1.msra.mxu0 %v615
        %703 = vmatprep.subr.mxu0 0.0
        %704 = vmatpush1.msra.mxu0 %v616
        %705 = vmatprep.subr.mxu0 0.0
        %706 = vmatpush1.msra.mxu0 %v617
        %707 = vmatprep.subr.mxu0 0.0
        %708 = vmatpush1.msra.mxu0 %v618
        %709 = vmatprep.subr.mxu0 0.0
        %710 = vmatpush1.msra.mxu0 %v619
        %711 = vmatprep.subr.mxu0 0.0
        %712 = vmatpush1.msra.mxu0 %v620
        %713 = vmatprep.subr.mxu0 0.0
        %714 = vmatpush1.msra.mxu0 %v621
        %715 = vmatprep.subr.mxu0 0.0
        %716 = vmatpush1.msra.mxu0 %v622
        %717 = vmatprep.subr.mxu0 0.0
        %718 = vmatpush1.msra.mxu0 %v623
        %719 = vmatprep.subr.mxu0 0.0
        %720 = vmatpush1.msra.mxu0 %v624
        %721 = vmatprep.subr.mxu0 0.0
        %722 = vmatpush1.msra.mxu0 %v625
        %723 = vmatprep.subr.mxu0 0.0
        %724 = vmatpush1.msra.mxu0 %v626
        %725 = vmatprep.subr.mxu0 0.0
        %726 = vmatpush1.msra.mxu0 %v627
        %727 = vmatprep.subr.mxu0 0.0
        %728 = vmatpush1.msra.mxu0 %v628
        %729 = vmatprep.subr.mxu0 0.0
        %730 = vmatpush1.msra.mxu0 %v629
        %731 = vmatprep.subr.mxu0 0.0
        %732 = vmatpush1.msra.mxu0 %v630
        %733 = vmatprep.subr.mxu0 0.0
        %734 = vmatpush1.msra.mxu0 %v631
        %735 = vmatprep.subr.mxu0 0.0
        %736 = vmatpush1.msra.mxu0 %v632
        %737 = vmatprep.subr.mxu0 0.0
        %738 = vmatpush1.msra.mxu0 %v633
        %739 = vmatprep.subr.mxu0 0.0
        %740 = vmatpush1.msra.mxu0 %v634
        %741 = vmatprep.subr.mxu0 0.0
        %742 = vmatpush1.msra.mxu0 %v635
        %743 = vmatprep.subr.mxu0 0.0
        %744 = vmatpush1.msra.mxu0 %v636
        %745 = vmatprep.subr.mxu0 0.0
        %746 = vmatpush1.msra.mxu0 %v637
        %747 = vmatprep.subr.mxu0 0.0
        %748 = vmatpush1.msra.mxu0 %v638
        %749 = vmatprep.subr.mxu0 0.0
        %750 = vmatpush1.msra.mxu0 %v639
        %751 = vmatprep.subr.mxu0 0.0
        %752 = vmatpush1.msra.mxu0 %v640
        %753 = vmatprep.mubr.f32.mxu0 %v578
        %754 = vmatmul.mubr.f32.gmra.mrb[0].mxu0 %v577
        %v755 = vpop.f32.mrb[0].mxu0
        %v756 = vadd.f32 %v642, %v755
        %v757 = vpop.f32.mrb[0].mxu0
        %758 = vmatprep.mubr.f32.mxu0 %v580
        %759 = vmatmul.mubr.f32.gmra.mrb[0].mxu0 %v579
        %v760 = vpop.f32.mrb[0].mxu0
        %v761 = vadd.f32 %v644, %v760
        %v762 = vpop.f32.mrb[0].mxu0
        %763 = vmatprep.mubr.f32.mxu0 %v582
        %764 = vmatmul.mubr.f32.gmra.mrb[0].mxu0 %v581
        %v765 = vpop.f32.mrb[0].mxu0
        %v766 = vadd.f32 %v646, %v765
        %v767 = vpop.f32.mrb[0].mxu0
        %768 = vmatprep.mubr.f32.mxu0 %v584
        %769 = vmatmul.mubr.f32.gmra.mrb[0].mxu0 %v583
        %v770 = vpop.f32.mrb[0].mxu0
        %v771 = vadd.f32 %v648, %v770
        %v772 = vpop.f32.mrb[0].mxu0
        %773 = vmatprep.mubr.f32.mxu0 %v586
        %774 = vmatmul.mubr.f32.gmra.mrb[0].mxu0 %v585
        %v775 = vpop.f32.mrb[0].mxu0
        %v776 = vadd.f32 %v650, %v775
        %v777 = vpop.f32.mrb[0].mxu0
        %778 = vmatprep.mubr.f32.mxu0 %v588
        %779 = vmatmul.mubr.f32.gmra.mrb[0].mxu0 %v587
        %v780 = vpop.f32.mrb[0].mxu0
        %v781 = vadd.f32 %v652, %v780
        %v782 = vpop.f32.mrb[0].mxu0
        %783 = vmatprep.mubr.f32.mxu0 %v590
        %784 = vmatmul.mubr.f32.gmra.mrb[0].mxu0 %v589
        %v785 = vpop.f32.mrb[0].mxu0
        %v786 = vadd.f32 %v654, %v785
        %v787 = vpop.f32.mrb[0].mxu0
        %788 = vmatprep.mubr.f32.mxu0 %v592
        %789 = vmatmul.mubr.f32.gmra.mrb[0].mxu0 %v591
        %v790 = vpop.f32.mrb[0].mxu0
        %v791 = vadd.f32 %v656, %v790
        %v792 = vpop.f32.mrb[0].mxu0
        %793 = vmatprep.mubr.f32.mxu0 %v594
        %794 = vmatmul.mubr.f32.gmra.mrb[0].mxu0 %v593
        %v795 = vpop.f32.mrb[0].mxu0
        %v796 = vadd.f32 %v658, %v795
        %v797 = vpop.f32.mrb[0].mxu0
        %798 = vmatprep.mubr.f32.mxu0 %v596
        %799 = vmatmul.mubr.f32.gmra.mrb[0].mxu0 %v595
        %v800 = vpop.f32.mrb[0].mxu0
        %v801 = vadd.f32 %v660, %v800
        %v802 = vpop.f32.mrb[0].mxu0
        %803 = vmatprep.mubr.f32.mxu0 %v598
        %804 = vmatmul.mubr.f32.gmra.mrb[0].mxu0 %v597
        %v805 = vpop.f32.mrb[0].mxu0
        %v806 = vadd.f32 %v662, %v805
        %v807 = vpop.f32.mrb[0].mxu0
        %808 = vmatprep.mubr.f32.mxu0 %v600
        %809 = vmatmul.mubr.f32.gmra.mrb[0].mxu0 %v599
        %v810 = vpop.f32.mrb[0].mxu0
        %v811 = vadd.f32 %v664, %v810
        %v812 = vpop.f32.mrb[0].mxu0
        %813 = vmatprep.mubr.f32.mxu0 %v602
        %814 = vmatmul.mubr.f32.gmra.mrb[0].mxu0 %v601
        %v815 = vpop.f32.mrb[0].mxu0
        %v816 = vadd.f32 %v666, %v815
        %v817 = vpop.f32.mrb[0].mxu0
        %818 = vmatprep.mubr.f32.mxu0 %v604
        %819 = vmatmul.mubr.f32.gmra.mrb[0].mxu0 %v603
        %v820 = vpop.f32.mrb[0].mxu0
        %v821 = vadd.f32 %v668, %v820
        %v822 = vpop.f32.mrb[0].mxu0
        %823 = vmatprep.mubr.f32.mxu0 %v606
        %824 = vmatmul.mubr.f32.gmra.mrb[0].mxu0 %v605
        %v825 = vpop.f32.mrb[0].mxu0
        %v826 = vadd.f32 %v670, %v825
        %v827 = vpop.f32.mrb[0].mxu0
        %828 = vmatprep.mubr.f32.mxu0 %v608
        %829 = vmatmul.mubr.f32.gmra.mrb[0].mxu0 %v607
        %v830 = vpop.f32.mrb[0].mxu0
        %v831 = vadd.f32 %v672, %v830
        %v832 = vpop.f32.mrb[0].mxu0
        %833 = vdwg.mxu0
        %v834 = vld [vmem:[%s4] sm:$0x1]
        %v836 = vlaneseq
        %v837 = vshrl.u32 %v836, 7
        %v838 = vsub.s32 0, %v837
        %v839 = vrot.slane %v834, %v838
        %v841 = vadd.f32 %v756, %v839
        %v842 = vadd.f32 %v761, %v839
        %v843 = vadd.f32 %v766, %v839
        %v844 = vadd.f32 %v771, %v839
        %v845 = vadd.f32 %v776, %v839
        %v846 = vadd.f32 %v781, %v839
        %v847 = vadd.f32 %v786, %v839
        %v848 = vadd.f32 %v791, %v839
        %v849 = vadd.f32 %v796, %v839
        %v850 = vadd.f32 %v801, %v839
        %v851 = vadd.f32 %v806, %v839
        %v852 = vadd.f32 %v811, %v839
        %v853 = vadd.f32 %v816, %v839
        %v854 = vadd.f32 %v821, %v839
        %v855 = vadd.f32 %v826, %v839
        %v856 = vadd.f32 %v831, %v839
        %v857 = vmax.f32 %v841, 0.0
        %v858 = vmax.f32 %v842, 0.0
        %v859 = vmax.f32 %v843, 0.0
        %v860 = vmax.f32 %v844, 0.0
        %v861 = vmax.f32 %v845, 0.0
        %v862 = vmax.f32 %v846, 0.0
        %v863 = vmax.f32 %v847, 0.0
        %v864 = vmax.f32 %v848, 0.0
        %v865 = vmax.f32 %v849, 0.0
        %v866 = vmax.f32 %v850, 0.0
        %v867 = vmax.f32 %v851, 0.0
        %v868 = vmax.f32 %v852, 0.0
        %v869 = vmax.f32 %v853, 0.0
        %v870 = vmax.f32 %v854, 0.0
        %v871 = vmax.f32 %v855, 0.0
        %v872 = vmax.f32 %v856, 0.0
        %s873 = scalar_lea.vmem [#allocation3], 32
        %v874 = vld [vmem:[%s873] sm:$0xff]
        %v875 = vld [vmem:[%s873 + $0x8] sm:$0xff]
        %v876 = vld [vmem:[%s873 + $0x10] sm:$0xff]
        %v877 = vld [vmem:[%s873 + $0x18] sm:$0xff]
        %v879 = vsel %vm287, %v857, 0
        %v882 = vsel %vm287, %v858, 0
        %v885 = vsel %vm287, %v859, 0
        %v888 = vsel %vm287, %v860, 0
        %v891 = vsel %vm287, %v861, 0
        %v894 = vsel %vm287, %v862, 0
        %v897 = vsel %vm287, %v863, 0
        %v900 = vsel %vm287, %v864, 0
        %v903 = vsel %vm287, %v865, 0
        %v906 = vsel %vm287, %v866, 0
        %v909 = vsel %vm287, %v867, 0
        %v912 = vsel %vm287, %v868, 0
        %v915 = vsel %vm287, %v869, 0
        %v918 = vsel %vm287, %v870, 0
        %v921 = vsel %vm287, %v871, 0
        %v924 = vsel %vm287, %v872, 0
        %926 = vmatprep.subr.mxu0 0.0
        %927 = vmatpush1.msra.mxu0 %v874
        %928 = vmatprep.subr.mxu0 0.0
        %929 = vmatpush1.msra.mxu0 %v875
        %930 = vmatprep.subr.mxu0 0.0
        %931 = vmatpush1.msra.mxu0 %v876
        %932 = vmatprep.subr.mxu0 0.0
        %933 = vmatpush1.msra.mxu0 %v877
        %934 = vmatprep.subr.mxu0 0.0
        %935 = vmatpush1.msra.mxu0 0.0
        %936 = vmatprep.subr.mxu0 0.0
        %937 = vmatpush1.msra.mxu0 0.0
        %938 = vmatprep.subr.mxu0 0.0
        %939 = vmatpush1.msra.mxu0 0.0
        %940 = vmatprep.subr.mxu0 0.0
        %941 = vmatpush1.msra.mxu0 0.0
        %942 = vmatprep.subr.mxu0 0.0
        %943 = vmatpush1.msra.mxu0 0.0
        %944 = vmatprep.subr.mxu0 0.0
        %945 = vmatpush1.msra.mxu0 0.0
        %946 = vmatprep.subr.mxu0 0.0
        %947 = vmatpush1.msra.mxu0 0.0
        %948 = vmatprep.subr.mxu0 0.0
        %949 = vmatpush1.msra.mxu0 0.0
        %950 = vmatprep.subr.mxu0 0.0
        %951 = vmatpush1.msra.mxu0 0.0
        %952 = vmatprep.subr.mxu0 0.0
        %953 = vmatpush1.msra.mxu0 0.0
        %954 = vmatprep.subr.mxu0 0.0
        %955 = vmatpush1.msra.mxu0 0.0
        %956 = vmatprep.subr.mxu0 0.0
        %957 = vmatpush1.msra.mxu0 0.0
        %958 = vmatprep.subr.mxu0 0.0
        %959 = vmatpush1.msra.mxu0 0.0
        %960 = vmatprep.subr.mxu0 0.0
        %961 = vmatpush1.msra.mxu0 0.0
        %962 = vmatprep.subr.mxu0 0.0
        %963 = vmatpush1.msra.mxu0 0.0
        %964 = vmatprep.subr.mxu0 0.0
        %965 = vmatpush1.msra.mxu0 0.0
        %966 = vmatprep.subr.mxu0 0.0
        %967 = vmatpush1.msra.mxu0 0.0
        %968 = vmatprep.subr.mxu0 0.0
        %969 = vmatpush1.msra.mxu0 0.0
        %970 = vmatprep.subr.mxu0 0.0
        %971 = vmatpush1.msra.mxu0 0.0
        %972 = vmatprep.subr.mxu0 0.0
        %973 = vmatpush1.msra.mxu0 0.0
        %974 = vmatprep.subr.mxu0 0.0
        %975 = vmatpush1.msra.mxu0 0.0
        %976 = vmatprep.subr.mxu0 0.0
        %977 = vmatpush1.msra.mxu0 0.0
        %978 = vmatprep.subr.mxu0 0.0
        %979 = vmatpush1.msra.mxu0 0.0
        %980 = vmatprep.subr.mxu0 0.0
        %981 = vmatpush1.msra.mxu0 0.0
        %982 = vmatprep.subr.mxu0 0.0
        %983 = vmatpush1.msra.mxu0 0.0
        %984 = vmatprep.subr.mxu0 0.0
        %985 = vmatpush1.msra.mxu0 0.0
        %986 = vmatprep.subr.mxu0 0.0
        %987 = vmatpush1.msra.mxu0 0.0
        %988 = vmatprep.subr.mxu0 0.0
        %989 = vmatpush1.msra.mxu0 0.0
        %990 = vmatprep.mubr.f32.mxu0 0.0
        %991 = vmatmul.mubr.f32.gmra.mrb[0].mxu0 %v879
        %v992 = vpop.f32.mrb[0].mxu0
        %v993 = vadd.f32 0.0, %v992
        %v994 = vpop.f32.mrb[0].mxu0
        %995 = vmatprep.mubr.f32.mxu0 0.0
        %996 = vmatmul.mubr.f32.gmra.mrb[0].mxu0 %v882
        %v997 = vpop.f32.mrb[0].mxu0
        %v998 = vadd.f32 0.0, %v997
        %v999 = vpop.f32.mrb[0].mxu0
        %1000 = vmatprep.mubr.f32.mxu0 0.0
        %1001 = vmatmul.mubr.f32.gmra.mrb[0].mxu0 %v885
        %v1002 = vpop.f32.mrb[0].mxu0
        %v1003 = vadd.f32 0.0, %v1002
        %v1004 = vpop.f32.mrb[0].mxu0
        %1005 = vmatprep.mubr.f32.mxu0 0.0
        %1006 = vmatmul.mubr.f32.gmra.mrb[0].mxu0 %v888
        %v1007 = vpop.f32.mrb[0].mxu0
        %v1008 = vadd.f32 0.0, %v1007
        %v1009 = vpop.f32.mrb[0].mxu0
        %1010 = vmatprep.mubr.f32.mxu0 0.0
        %1011 = vmatmul.mubr.f32.gmra.mrb[0].mxu0 %v891
        %v1012 = vpop.f32.mrb[0].mxu0
        %v1013 = vadd.f32 0.0, %v1012
        %v1014 = vpop.f32.mrb[0].mxu0
        %1015 = vmatprep.mubr.f32.mxu0 0.0
        %1016 = vmatmul.mubr.f32.gmra.mrb[0].mxu0 %v894
        %v1017 = vpop.f32.mrb[0].mxu0
        %v1018 = vadd.f32 0.0, %v1017
        %v1019 = vpop.f32.mrb[0].mxu0
        %1020 = vmatprep.mubr.f32.mxu0 0.0
        %1021 = vmatmul.mubr.f32.gmra.mrb[0].mxu0 %v897
        %v1022 = vpop.f32.mrb[0].mxu0
        %v1023 = vadd.f32 0.0, %v1022
        %v1024 = vpop.f32.mrb[0].mxu0
        %1025 = vmatprep.mubr.f32.mxu0 0.0
        %1026 = vmatmul.mubr.f32.gmra.mrb[0].mxu0 %v900
        %v1027 = vpop.f32.mrb[0].mxu0
        %v1028 = vadd.f32 0.0, %v1027
        %v1029 = vpop.f32.mrb[0].mxu0
        %1030 = vmatprep.mubr.f32.mxu0 0.0
        %1031 = vmatmul.mubr.f32.gmra.mrb[0].mxu0 %v903
        %v1032 = vpop.f32.mrb[0].mxu0
        %v1033 = vadd.f32 0.0, %v1032
        %v1034 = vpop.f32.mrb[0].mxu0
        %1035 = vmatprep.mubr.f32.mxu0 0.0
        %1036 = vmatmul.mubr.f32.gmra.mrb[0].mxu0 %v906
        %v1037 = vpop.f32.mrb[0].mxu0
        %v1038 = vadd.f32 0.0, %v1037
        %v1039 = vpop.f32.mrb[0].mxu0
        %1040 = vmatprep.mubr.f32.mxu0 0.0
        %1041 = vmatmul.mubr.f32.gmra.mrb[0].mxu0 %v909
        %v1042 = vpop.f32.mrb[0].mxu0
        %v1043 = vadd.f32 0.0, %v1042
        %v1044 = vpop.f32.mrb[0].mxu0
        %1045 = vmatprep.mubr.f32.mxu0 0.0
        %1046 = vmatmul.mubr.f32.gmra.mrb[0].mxu0 %v912
        %v1047 = vpop.f32.mrb[0].mxu0
        %v1048 = vadd.f32 0.0, %v1047
        %v1049 = vpop.f32.mrb[0].mxu0
        %1050 = vmatprep.mubr.f32.mxu0 0.0
        %1051 = vmatmul.mubr.f32.gmra.mrb[0].mxu0 %v915
        %v1052 = vpop.f32.mrb[0].mxu0
        %v1053 = vadd.f32 0.0, %v1052
        %v1054 = vpop.f32.mrb[0].mxu0
        %1055 = vmatprep.mubr.f32.mxu0 0.0
        %1056 = vmatmul.mubr.f32.gmra.mrb[0].mxu0 %v918
        %v1057 = vpop.f32.mrb[0].mxu0
        %v1058 = vadd.f32 0.0, %v1057
        %v1059 = vpop.f32.mrb[0].mxu0
        %1060 = vmatprep.mubr.f32.mxu0 0.0
        %1061 = vmatmul.mubr.f32.gmra.mrb[0].mxu0 %v921
        %v1062 = vpop.f32.mrb[0].mxu0
        %v1063 = vadd.f32 0.0, %v1062
        %v1064 = vpop.f32.mrb[0].mxu0
        %1065 = vmatprep.mubr.f32.mxu0 0.0
        %1066 = vmatmul.mubr.f32.gmra.mrb[0].mxu0 %v924
        %v1067 = vpop.f32.mrb[0].mxu0
        %v1068 = vadd.f32 0.0, %v1067
        %v1069 = vpop.f32.mrb[0].mxu0
        %1070 = vdwg.mxu0
        %1071 = vst.msk [vmem:[#allocation2] sm:$0xff] %vm287, %v993
        %1072 = vst.msk [vmem:[#allocation2 + $0x8] sm:$0xff] %vm287, %v998
        %1073 = vst.msk [vmem:[#allocation2 + $0x10] sm:$0xff] %vm287, %v1003
        %1074 = vst.msk [vmem:[#allocation2 + $0x18] sm:$0xff] %vm287, %v1008
        %1075 = vst.msk [vmem:[#allocation2 + $0x20] sm:$0xff] %vm287, %v1013
        %1076 = vst.msk [vmem:[#allocation2 + $0x28] sm:$0xff] %vm287, %v1018
        %1077 = vst.msk [vmem:[#allocation2 + $0x30] sm:$0xff] %vm287, %v1023
        %1078 = vst.msk [vmem:[#allocation2 + $0x38] sm:$0xff] %vm287, %v1028
        %1079 = vst.msk [vmem:[#allocation2 + $0x40] sm:$0xff] %vm287, %v1033
        %1080 = vst.msk [vmem:[#allocation2 + $0x48] sm:$0xff] %vm287, %v1038
        %1081 = vst.msk [vmem:[#allocation2 + $0x50] sm:$0xff] %vm287, %v1043
        %1082 = vst.msk [vmem:[#allocation2 + $0x58] sm:$0xff] %vm287, %v1048
        %1083 = vst.msk [vmem:[#allocation2 + $0x60] sm:$0xff] %vm287, %v1053
        %1084 = vst.msk [vmem:[#allocation2 + $0x68] sm:$0xff] %vm287, %v1058
        %1085 = vst.msk [vmem:[#allocation2 + $0x70] sm:$0xff] %vm287, %v1063
        %1086 = vst.msk [vmem:[#allocation2 + $0x78] sm:$0xff] %vm287, %v1068
        %1103 = vrot.lane.b32.xlu0 %v993, 96
        %v1104 = vpop.permute.xlu0 %1103
        %1105 = vrot.lane.b32.xlu0 %v998, 96
        %v1106 = vpop.permute.xlu0 %1105
        %1107 = vrot.lane.b32.xlu0 %v1003, 96
        %v1108 = vpop.permute.xlu0 %1107
        %1109 = vrot.lane.b32.xlu0 %v1008, 96
        %v1110 = vpop.permute.xlu0 %1109
        %1111 = vrot.lane.b32.xlu0 %v1013, 96
        %v1112 = vpop.permute.xlu0 %1111
        %1113 = vrot.lane.b32.xlu0 %v1018, 96
        %v1114 = vpop.permute.xlu0 %1113
        %1115 = vrot.lane.b32.xlu0 %v1023, 96
        %v1116 = vpop.permute.xlu0 %1115
        %1117 = vrot.lane.b32.xlu0 %v1028, 96
        %v1118 = vpop.permute.xlu0 %1117
        %1119 = vrot.lane.b32.xlu0 %v1033, 96
        %v1120 = vpop.permute.xlu0 %1119
        %1121 = vrot.lane.b32.xlu0 %v1038, 96
        %v1122 = vpop.permute.xlu0 %1121
        %1123 = vrot.lane.b32.xlu0 %v1043, 96
        %v1124 = vpop.permute.xlu0 %1123
        %1125 = vrot.lane.b32.xlu0 %v1048, 96
        %v1126 = vpop.permute.xlu0 %1125
        %1127 = vrot.lane.b32.xlu0 %v1053, 96
        %v1128 = vpop.permute.xlu0 %1127
        %1129 = vrot.lane.b32.xlu0 %v1058, 96
        %v1130 = vpop.permute.xlu0 %1129
        %1131 = vrot.lane.b32.xlu0 %v1063, 96
        %v1132 = vpop.permute.xlu0 %1131
        %1133 = vrot.lane.b32.xlu0 %v1068, 96
        %v1134 = vpop.permute.xlu0 %1133
        %1151 = vst.msk [vmem:[#allocation2 + $0x80] sm:$0xff] %vm287, %v1104
        %1152 = vst.msk [vmem:[#allocation2 + $0x88] sm:$0xff] %vm287, %v1106
        %1153 = vst.msk [vmem:[#allocation2 + $0x90] sm:$0xff] %vm287, %v1108
        %1154 = vst.msk [vmem:[#allocation2 + $0x98] sm:$0xff] %vm287, %v1110
        %1155 = vst.msk [vmem:[#allocation2 + $0xa0] sm:$0xff] %vm287, %v1112
        %1156 = vst.msk [vmem:[#allocation2 + $0xa8] sm:$0xff] %vm287, %v1114
        %1157 = vst.msk [vmem:[#allocation2 + $0xb0] sm:$0xff] %vm287, %v1116
        %1158 = vst.msk [vmem:[#allocation2 + $0xb8] sm:$0xff] %vm287, %v1118
        %1159 = vst.msk [vmem:[#allocation2 + $0xc0] sm:$0xff] %vm287, %v1120
        %1160 = vst.msk [vmem:[#allocation2 + $0xc8] sm:$0xff] %vm287, %v1122
        %1161 = vst.msk [vmem:[#allocation2 + $0xd0] sm:$0xff] %vm287, %v1124
        %1162 = vst.msk [vmem:[#allocation2 + $0xd8] sm:$0xff] %vm287, %v1126
        %1163 = vst.msk [vmem:[#allocation2 + $0xe0] sm:$0xff] %vm287, %v1128
        %1164 = vst.msk [vmem:[#allocation2 + $0xe8] sm:$0xff] %vm287, %v1130
        %1165 = vst.msk [vmem:[#allocation2 + $0xf0] sm:$0xff] %vm287, %v1132
        %1166 = vst.msk [vmem:[#allocation2 + $0xf8] sm:$0xff] %vm287, %v1134
        %v1167 = vld [vmem:[%s1] sm:$0xff]
        %v1168 = vld [vmem:[%s1 + $0x8] sm:$0xff]
        %v1169 = vld [vmem:[%s1 + $0x10] sm:$0xff]
        %v1170 = vld [vmem:[%s1 + $0x18] sm:$0xff]
        %v1171 = vld [vmem:[%s1 + $0x20] sm:$0xff]
        %v1172 = vld [vmem:[%s1 + $0x28] sm:$0xff]
        %v1173 = vld [vmem:[%s1 + $0x30] sm:$0xff]
        %v1174 = vld [vmem:[%s1 + $0x38] sm:$0xff]
        %v1175 = vld [vmem:[%s1 + $0x40] sm:$0xff]
        %v1176 = vld [vmem:[%s1 + $0x48] sm:$0xff]
        %v1177 = vld [vmem:[%s1 + $0x50] sm:$0xff]
        %v1178 = vld [vmem:[%s1 + $0x58] sm:$0xff]
        %v1179 = vld [vmem:[%s1 + $0x60] sm:$0xff]
        %v1180 = vld [vmem:[%s1 + $0x68] sm:$0xff]
        %v1181 = vld [vmem:[%s1 + $0x70] sm:$0xff]
        %v1182 = vld [vmem:[%s1 + $0x78] sm:$0xff]
        %v1183 = vld [vmem:[%s1 + $0x80] sm:$0xff]
        %v1184 = vld [vmem:[%s1 + $0x88] sm:$0xff]
        %v1185 = vld [vmem:[%s1 + $0x90] sm:$0xff]
        %v1186 = vld [vmem:[%s1 + $0x98] sm:$0xff]
        %v1187 = vld [vmem:[%s1 + $0xa0] sm:$0xff]
        %v1188 = vld [vmem:[%s1 + $0xa8] sm:$0xff]
        %v1189 = vld [vmem:[%s1 + $0xb0] sm:$0xff]
        %v1190 = vld [vmem:[%s1 + $0xb8] sm:$0xff]
        %v1191 = vld [vmem:[%s1 + $0xc0] sm:$0xff]
        %v1192 = vld [vmem:[%s1 + $0xc8] sm:$0xff]
        %v1193 = vld [vmem:[%s1 + $0xd0] sm:$0xff]
        %v1194 = vld [vmem:[%s1 + $0xd8] sm:$0xff]
        %v1195 = vld [vmem:[%s1 + $0xe0] sm:$0xff]
        %v1196 = vld [vmem:[%s1 + $0xe8] sm:$0xff]
        %v1197 = vld [vmem:[%s1 + $0xf0] sm:$0xff]
        %v1198 = vld [vmem:[%s1 + $0xf8] sm:$0xff]
        %v1199 = vld [vmem:[#allocation2] sm:$0xff]
        %v1200 = vld [vmem:[#allocation2 + $0x8] sm:$0xff]
        %v1201 = vld [vmem:[#allocation2 + $0x10] sm:$0xff]
        %v1202 = vld [vmem:[#allocation2 + $0x18] sm:$0xff]
        %v1203 = vld [vmem:[#allocation2 + $0x20] sm:$0xff]
        %v1204 = vld [vmem:[#allocation2 + $0x28] sm:$0xff]
        %v1205 = vld [vmem:[#allocation2 + $0x30] sm:$0xff]
        %v1206 = vld [vmem:[#allocation2 + $0x38] sm:$0xff]
        %v1207 = vld [vmem:[#allocation2 + $0x40] sm:$0xff]
        %v1208 = vld [vmem:[#allocation2 + $0x48] sm:$0xff]
        %v1209 = vld [vmem:[#allocation2 + $0x50] sm:$0xff]
        %v1210 = vld [vmem:[#allocation2 + $0x58] sm:$0xff]
        %v1211 = vld [vmem:[#allocation2 + $0x60] sm:$0xff]
        %v1212 = vld [vmem:[#allocation2 + $0x68] sm:$0xff]
        %v1213 = vld [vmem:[#allocation2 + $0x70] sm:$0xff]
        %v1214 = vld [vmem:[#allocation2 + $0x78] sm:$0xff]
        %v1215 = vld [vmem:[#allocation2 + $0x80] sm:$0xff]
        %v1216 = vld [vmem:[#allocation2 + $0x88] sm:$0xff]
        %v1217 = vld [vmem:[#allocation2 + $0x90] sm:$0xff]
        %v1218 = vld [vmem:[#allocation2 + $0x98] sm:$0xff]
        %v1219 = vld [vmem:[#allocation2 + $0xa0] sm:$0xff]
        %v1220 = vld [vmem:[#allocation2 + $0xa8] sm:$0xff]
        %v1221 = vld [vmem:[#allocation2 + $0xb0] sm:$0xff]
        %v1222 = vld [vmem:[#allocation2 + $0xb8] sm:$0xff]
        %v1223 = vld [vmem:[#allocation2 + $0xc0] sm:$0xff]
        %v1224 = vld [vmem:[#allocation2 + $0xc8] sm:$0xff]
        %v1225 = vld [vmem:[#allocation2 + $0xd0] sm:$0xff]
        %v1226 = vld [vmem:[#allocation2 + $0xd8] sm:$0xff]
        %v1227 = vld [vmem:[#allocation2 + $0xe0] sm:$0xff]
        %v1228 = vld [vmem:[#allocation2 + $0xe8] sm:$0xff]
        %v1229 = vld [vmem:[#allocation2 + $0xf0] sm:$0xff]
        %v1230 = vld [vmem:[#allocation2 + $0xf8] sm:$0xff]
        %1231 = vrot.lane.b32.xlu0 %v993, 64
        %v1232 = vpop.permute.xlu0 %1231
        %1233 = vrot.lane.b32.xlu0 %v998, 64
        %v1234 = vpop.permute.xlu0 %1233
        %1235 = vrot.lane.b32.xlu0 %v1003, 64
        %v1236 = vpop.permute.xlu0 %1235
        %1237 = vrot.lane.b32.xlu0 %v1008, 64
        %v1238 = vpop.permute.xlu0 %1237
        %1239 = vrot.lane.b32.xlu0 %v1013, 64
        %v1240 = vpop.permute.xlu0 %1239
        %1241 = vrot.lane.b32.xlu0 %v1018, 64
        %v1242 = vpop.permute.xlu0 %1241
        %1243 = vrot.lane.b32.xlu0 %v1023, 64
        %v1244 = vpop.permute.xlu0 %1243
        %1245 = vrot.lane.b32.xlu0 %v1028, 64
        %v1246 = vpop.permute.xlu0 %1245
        %1247 = vrot.lane.b32.xlu0 %v1033, 64
        %v1248 = vpop.permute.xlu0 %1247
        %1249 = vrot.lane.b32.xlu0 %v1038, 64
        %v1250 = vpop.permute.xlu0 %1249
        %1251 = vrot.lane.b32.xlu0 %v1043, 64
        %v1252 = vpop.permute.xlu0 %1251
        %1253 = vrot.lane.b32.xlu0 %v1048, 64
        %v1254 = vpop.permute.xlu0 %1253
        %1255 = vrot.lane.b32.xlu0 %v1053, 64
        %v1256 = vpop.permute.xlu0 %1255
        %1257 = vrot.lane.b32.xlu0 %v1058, 64
        %v1258 = vpop.permute.xlu0 %1257
        %1259 = vrot.lane.b32.xlu0 %v1063, 64
        %v1260 = vpop.permute.xlu0 %1259
        %1261 = vrot.lane.b32.xlu0 %v1068, 64
        %v1262 = vpop.permute.xlu0 %1261
        %1279 = vmatprep.subr.mxu0 0.0
        %1280 = vmatpush1.msra.mxu0 %v1199
        %1281 = vmatprep.subr.mxu0 0.0
        %1282 = vmatpush1.msra.mxu0 %v1200
        %1283 = vmatprep.subr.mxu0 0.0
        %1284 = vmatpush1.msra.mxu0 %v1201
        %1285 = vmatprep.subr.mxu0 0.0
        %1286 = vmatpush1.msra.mxu0 %v1202
        %1287 = vmatprep.subr.mxu0 0.0
        %1288 = vmatpush1.msra.mxu0 %v1203
        %1289 = vmatprep.subr.mxu0 0.0
        %1290 = vmatpush1.msra.mxu0 %v1204
        %1291 = vmatprep.subr.mxu0 0.0
        %1292 = vmatpush1.msra.mxu0 %v1205
        %1293 = vmatprep.subr.mxu0 0.0
        %1294 = vmatpush1.msra.mxu0 %v1206
        %1295 = vmatprep.subr.mxu0 0.0
        %1296 = vmatpush1.msra.mxu0 %v1207
        %1297 = vmatprep.subr.mxu0 0.0
        %1298 = vmatpush1.msra.mxu0 %v1208
        %1299 = vmatprep.subr.mxu0 0.0
        %1300 = vmatpush1.msra.mxu0 %v1209
        %1301 = vmatprep.subr.mxu0 0.0
        %1302 = vmatpush1.msra.mxu0 %v1210
        %1303 = vmatprep.subr.mxu0 0.0
        %1304 = vmatpush1.msra.mxu0 %v1211
        %1305 = vmatprep.subr.mxu0 0.0
        %1306 = vmatpush1.msra.mxu0 %v1212
        %1307 = vmatprep.subr.mxu0 0.0
        %1308 = vmatpush1.msra.mxu0 %v1213
        %1309 = vmatprep.subr.mxu0 0.0
        %1310 = vmatpush1.msra.mxu0 %v1214
        %1311 = vmatprep.subr.mxu0 0.0
        %1312 = vmatpush1.msra.mxu0 %v1215
        %1313 = vmatprep.subr.mxu0 0.0
        %1314 = vmatpush1.msra.mxu0 %v1216
        %1315 = vmatprep.subr.mxu0 0.0
        %1316 = vmatpush1.msra.mxu0 %v1217
        %1317 = vmatprep.subr.mxu0 0.0
        %1318 = vmatpush1.msra.mxu0 %v1218
        %1319 = vmatprep.subr.mxu0 0.0
        %1320 = vmatpush1.msra.mxu0 %v1219
        %1321 = vmatprep.subr.mxu0 0.0
        %1322 = vmatpush1.msra.mxu0 %v1220
        %1323 = vmatprep.subr.mxu0 0.0
        %1324 = vmatpush1.msra.mxu0 %v1221
        %1325 = vmatprep.subr.mxu0 0.0
        %1326 = vmatpush1.msra.mxu0 %v1222
        %1327 = vmatprep.subr.mxu0 0.0
        %1328 = vmatpush1.msra.mxu0 %v1223
        %1329 = vmatprep.subr.mxu0 0.0
        %1330 = vmatpush1.msra.mxu0 %v1224
        %1331 = vmatprep.subr.mxu0 0.0
        %1332 = vmatpush1.msra.mxu0 %v1225
        %1333 = vmatprep.subr.mxu0 0.0
        %1334 = vmatpush1.msra.mxu0 %v1226
        %1335 = vmatprep.subr.mxu0 0.0
        %1336 = vmatpush1.msra.mxu0 %v1227
        %1337 = vmatprep.subr.mxu0 0.0
        %1338 = vmatpush1.msra.mxu0 %v1228
        %1339 = vmatprep.subr.mxu0 0.0
        %1340 = vmatpush1.msra.mxu0 %v1229
        %1341 = vmatprep.subr.mxu0 0.0
        %1342 = vmatpush1.msra.mxu0 %v1230
        %1343 = vmatprep.mubr.f32.mxu0 %v1168
        %1344 = vmatmul.mubr.f32.gmra.mrb[0].mxu0 %v1167
        %v1345 = vpop.f32.mrb[0].mxu0
        %v1346 = vadd.f32 %v1232, %v1345
        %v1347 = vpop.f32.mrb[0].mxu0
        %1348 = vmatprep.mubr.f32.mxu0 %v1170
        %1349 = vmatmul.mubr.f32.gmra.mrb[0].mxu0 %v1169
        %v1350 = vpop.f32.mrb[0].mxu0
        %v1351 = vadd.f32 %v1234, %v1350
        %v1352 = vpop.f32.mrb[0].mxu0
        %1353 = vmatprep.mubr.f32.mxu0 %v1172
        %1354 = vmatmul.mubr.f32.gmra.mrb[0].mxu0 %v1171
        %v1355 = vpop.f32.mrb[0].mxu0
        %v1356 = vadd.f32 %v1236, %v1355
        %v1357 = vpop.f32.mrb[0].mxu0
        %1358 = vmatprep.mubr.f32.mxu0 %v1174
        %1359 = vmatmul.mubr.f32.gmra.mrb[0].mxu0 %v1173
        %v1360 = vpop.f32.mrb[0].mxu0
        %v1361 = vadd.f32 %v1238, %v1360
        %v1362 = vpop.f32.mrb[0].mxu0
        %1363 = vmatprep.mubr.f32.mxu0 %v1176
        %1364 = vmatmul.mubr.f32.gmra.mrb[0].mxu0 %v1175
        %v1365 = vpop.f32.mrb[0].mxu0
        %v1366 = vadd.f32 %v1240, %v1365
        %v1367 = vpop.f32.mrb[0].mxu0
        %1368 = vmatprep.mubr.f32.mxu0 %v1178
        %1369 = vmatmul.mubr.f32.gmra.mrb[0].mxu0 %v1177
        %v1370 = vpop.f32.mrb[0].mxu0
        %v1371 = vadd.f32 %v1242, %v1370
        %v1372 = vpop.f32.mrb[0].mxu0
        %1373 = vmatprep.mubr.f32.mxu0 %v1180
        %1374 = vmatmul.mubr.f32.gmra.mrb[0].mxu0 %v1179
        %v1375 = vpop.f32.mrb[0].mxu0
        %v1376 = vadd.f32 %v1244, %v1375
        %v1377 = vpop.f32.mrb[0].mxu0
        %1378 = vmatprep.mubr.f32.mxu0 %v1182
        %1379 = vmatmul.mubr.f32.gmra.mrb[0].mxu0 %v1181
        %v1380 = vpop.f32.mrb[0].mxu0
        %v1381 = vadd.f32 %v1246, %v1380
        %v1382 = vpop.f32.mrb[0].mxu0
        %1383 = vmatprep.mubr.f32.mxu0 %v1184
        %1384 = vmatmul.mubr.f32.gmra.mrb[0].mxu0 %v1183
        %v1385 = vpop.f32.mrb[0].mxu0
        %v1386 = vadd.f32 %v1248, %v1385
        %v1387 = vpop.f32.mrb[0].mxu0
        %1388 = vmatprep.mubr.f32.mxu0 %v1186
        %1389 = vmatmul.mubr.f32.gmra.mrb[0].mxu0 %v1185
        %v1390 = vpop.f32.mrb[0].mxu0
        %v1391 = vadd.f32 %v1250, %v1390
        %v1392 = vpop.f32.mrb[0].mxu0
        %1393 = vmatprep.mubr.f32.mxu0 %v1188
        %1394 = vmatmul.mubr.f32.gmra.mrb[0].mxu0 %v1187
        %v1395 = vpop.f32.mrb[0].mxu0
        %v1396 = vadd.f32 %v1252, %v1395
        %v1397 = vpop.f32.mrb[0].mxu0
        %1398 = vmatprep.mubr.f32.mxu0 %v1190
        %1399 = vmatmul.mubr.f32.gmra.mrb[0].mxu0 %v1189
        %v1400 = vpop.f32.mrb[0].mxu0
        %v1401 = vadd.f32 %v1254, %v1400
        %v1402 = vpop.f32.mrb[0].mxu0
        %1403 = vmatprep.mubr.f32.mxu0 %v1192
        %1404 = vmatmul.mubr.f32.gmra.mrb[0].mxu0 %v1191
        %v1405 = vpop.f32.mrb[0].mxu0
        %v1406 = vadd.f32 %v1256, %v1405
        %v1407 = vpop.f32.mrb[0].mxu0
        %1408 = vmatprep.mubr.f32.mxu0 %v1194
        %1409 = vmatmul.mubr.f32.gmra.mrb[0].mxu0 %v1193
        %v1410 = vpop.f32.mrb[0].mxu0
        %v1411 = vadd.f32 %v1258, %v1410
        %v1412 = vpop.f32.mrb[0].mxu0
        %1413 = vmatprep.mubr.f32.mxu0 %v1196
        %1414 = vmatmul.mubr.f32.gmra.mrb[0].mxu0 %v1195
        %v1415 = vpop.f32.mrb[0].mxu0
        %v1416 = vadd.f32 %v1260, %v1415
        %v1417 = vpop.f32.mrb[0].mxu0
        %1418 = vmatprep.mubr.f32.mxu0 %v1198
        %1419 = vmatmul.mubr.f32.gmra.mrb[0].mxu0 %v1197
        %v1420 = vpop.f32.mrb[0].mxu0
        %v1421 = vadd.f32 %v1262, %v1420
        %v1422 = vpop.f32.mrb[0].mxu0
        %1423 = vdwg.mxu0
        %s1424 = scalar_lea.vmem %s4, 1
        %v1425 = vld [vmem:[%s1424] sm:$0x1]
        %v1427 = vlaneseq
        %v1428 = vshrl.u32 %v1427, 7
        %v1429 = vsub.s32 0, %v1428
        %v1430 = vrot.slane %v1425, %v1429
        %v1432 = vadd.f32 %v1346, %v1430
        %v1433 = vadd.f32 %v1351, %v1430
        %v1434 = vadd.f32 %v1356, %v1430
        %v1435 = vadd.f32 %v1361, %v1430
        %v1436 = vadd.f32 %v1366, %v1430
        %v1437 = vadd.f32 %v1371, %v1430
        %v1438 = vadd.f32 %v1376, %v1430
        %v1439 = vadd.f32 %v1381, %v1430
        %v1440 = vadd.f32 %v1386, %v1430
        %v1441 = vadd.f32 %v1391, %v1430
        %v1442 = vadd.f32 %v1396, %v1430
        %v1443 = vadd.f32 %v1401, %v1430
        %v1444 = vadd.f32 %v1406, %v1430
        %v1445 = vadd.f32 %v1411, %v1430
        %v1446 = vadd.f32 %v1416, %v1430
        %v1447 = vadd.f32 %v1421, %v1430
        %v1448 = vmax.f32 %v1432, 0.0
        %v1449 = vmax.f32 %v1433, 0.0
        %v1450 = vmax.f32 %v1434, 0.0
        %v1451 = vmax.f32 %v1435, 0.0
        %v1452 = vmax.f32 %v1436, 0.0
        %v1453 = vmax.f32 %v1437, 0.0
        %v1454 = vmax.f32 %v1438, 0.0
        %v1455 = vmax.f32 %v1439, 0.0
        %v1456 = vmax.f32 %v1440, 0.0
        %v1457 = vmax.f32 %v1441, 0.0
        %v1458 = vmax.f32 %v1442, 0.0
        %v1459 = vmax.f32 %v1443, 0.0
        %v1460 = vmax.f32 %v1444, 0.0
        %v1461 = vmax.f32 %v1445, 0.0
        %v1462 = vmax.f32 %v1446, 0.0
        %v1463 = vmax.f32 %v1447, 0.0
        %s1464 = scalar_lea.vmem [#allocation3], 64
        %v1465 = vld [vmem:[%s1464] sm:$0xff]
        %v1466 = vld [vmem:[%s1464 + $0x8] sm:$0xff]
        %v1467 = vld [vmem:[%s1464 + $0x10] sm:$0xff]
        %v1468 = vld [vmem:[%s1464 + $0x18] sm:$0xff]
        %v1470 = vsel %vm287, %v1448, 0
        %v1473 = vsel %vm287, %v1449, 0
        %v1476 = vsel %vm287, %v1450, 0
        %v1479 = vsel %vm287, %v1451, 0
        %v1482 = vsel %vm287, %v1452, 0
        %v1485 = vsel %vm287, %v1453, 0
        %v1488 = vsel %vm287, %v1454, 0
        %v1491 = vsel %vm287, %v1455, 0
        %v1494 = vsel %vm287, %v1456, 0
        %v1497 = vsel %vm287, %v1457, 0
        %v1500 = vsel %vm287, %v1458, 0
        %v1503 = vsel %vm287, %v1459, 0
        %v1506 = vsel %vm287, %v1460, 0
        %v1509 = vsel %vm287, %v1461, 0
        %v1512 = vsel %vm287, %v1462, 0
        %v1515 = vsel %vm287, %v1463, 0
        %1517 = vmatprep.subr.mxu0 0.0
        %1518 = vmatpush1.msra.mxu0 %v1465
        %1519 = vmatprep.subr.mxu0 0.0
        %1520 = vmatpush1.msra.mxu0 %v1466
        %1521 = vmatprep.subr.mxu0 0.0
        %1522 = vmatpush1.msra.mxu0 %v1467
        %1523 = vmatprep.subr.mxu0 0.0
        %1524 = vmatpush1.msra.mxu0 %v1468
        %1525 = vmatprep.subr.mxu0 0.0
        %1526 = vmatpush1.msra.mxu0 0.0
        %1527 = vmatprep.subr.mxu0 0.0
        %1528 = vmatpush1.msra.mxu0 0.0
        %1529 = vmatprep.subr.mxu0 0.0
        %1530 = vmatpush1.msra.mxu0 0.0
        %1531 = vmatprep.subr.mxu0 0.0
        %1532 = vmatpush1.msra.mxu0 0.0
        %1533 = vmatprep.subr.mxu0 0.0
        %1534 = vmatpush1.msra.mxu0 0.0
        %1535 = vmatprep.subr.mxu0 0.0
        %1536 = vmatpush1.msra.mxu0 0.0
        %1537 = vmatprep.subr.mxu0 0.0
        %1538 = vmatpush1.msra.mxu0 0.0
        %1539 = vmatprep.subr.mxu0 0.0
        %1540 = vmatpush1.msra.mxu0 0.0
        %1541 = vmatprep.subr.mxu0 0.0
        %1542 = vmatpush1.msra.mxu0 0.0
        %1543 = vmatprep.subr.mxu0 0.0
        %1544 = vmatpush1.msra.mxu0 0.0
        %1545 = vmatprep.subr.mxu0 0.0
        %1546 = vmatpush1.msra.mxu0 0.0
        %1547 = vmatprep.subr.mxu0 0.0
        %1548 = vmatpush1.msra.mxu0 0.0
        %1549 = vmatprep.subr.mxu0 0.0
        %1550 = vmatpush1.msra.mxu0 0.0
        %1551 = vmatprep.subr.mxu0 0.0
        %1552 = vmatpush1.msra.mxu0 0.0
        %1553 = vmatprep.subr.mxu0 0.0
        %1554 = vmatpush1.msra.mxu0 0.0
        %1555 = vmatprep.subr.mxu0 0.0
        %1556 = vmatpush1.msra.mxu0 0.0
        %1557 = vmatprep.subr.mxu0 0.0
        %1558 = vmatpush1.msra.mxu0 0.0
        %1559 = vmatprep.subr.mxu0 0.0
        %1560 = vmatpush1.msra.mxu0 0.0
        %1561 = vmatprep.subr.mxu0 0.0
        %1562 = vmatpush1.msra.mxu0 0.0
        %1563 = vmatprep.subr.mxu0 0.0
        %1564 = vmatpush1.msra.mxu0 0.0
        %1565 = vmatprep.subr.mxu0 0.0
        %1566 = vmatpush1.msra.mxu0 0.0
        %1567 = vmatprep.subr.mxu0 0.0
        %1568 = vmatpush1.msra.mxu0 0.0
        %1569 = vmatprep.subr.mxu0 0.0
        %1570 = vmatpush1.msra.mxu0 0.0
        %1571 = vmatprep.subr.mxu0 0.0
        %1572 = vmatpush1.msra.mxu0 0.0
        %1573 = vmatprep.subr.mxu0 0.0
        %1574 = vmatpush1.msra.mxu0 0.0
        %1575 = vmatprep.subr.mxu0 0.0
        %1576 = vmatpush1.msra.mxu0 0.0
        %1577 = vmatprep.subr.mxu0 0.0
        %1578 = vmatpush1.msra.mxu0 0.0
        %1579 = vmatprep.subr.mxu0 0.0
        %1580 = vmatpush1.msra.mxu0 0.0
        %1581 = vmatprep.mubr.f32.mxu0 0.0
        %1582 = vmatmul.mubr.f32.gmra.mrb[0].mxu0 %v1470
        %v1583 = vpop.f32.mrb[0].mxu0
        %v1584 = vadd.f32 0.0, %v1583
        %v1585 = vpop.f32.mrb[0].mxu0
        %1586 = vmatprep.mubr.f32.mxu0 0.0
        %1587 = vmatmul.mubr.f32.gmra.mrb[0].mxu0 %v1473
        %v1588 = vpop.f32.mrb[0].mxu0
        %v1589 = vadd.f32 0.0, %v1588
        %v1590 = vpop.f32.mrb[0].mxu0
        %1591 = vmatprep.mubr.f32.mxu0 0.0
        %1592 = vmatmul.mubr.f32.gmra.mrb[0].mxu0 %v1476
        %v1593 = vpop.f32.mrb[0].mxu0
        %v1594 = vadd.f32 0.0, %v1593
        %v1595 = vpop.f32.mrb[0].mxu0
        %1596 = vmatprep.mubr.f32.mxu0 0.0
        %1597 = vmatmul.mubr.f32.gmra.mrb[0].mxu0 %v1479
        %v1598 = vpop.f32.mrb[0].mxu0
        %v1599 = vadd.f32 0.0, %v1598
        %v1600 = vpop.f32.mrb[0].mxu0
        %1601 = vmatprep.mubr.f32.mxu0 0.0
        %1602 = vmatmul.mubr.f32.gmra.mrb[0].mxu0 %v1482
        %v1603 = vpop.f32.mrb[0].mxu0
        %v1604 = vadd.f32 0.0, %v1603
        %v1605 = vpop.f32.mrb[0].mxu0
        %1606 = vmatprep.mubr.f32.mxu0 0.0
        %1607 = vmatmul.mubr.f32.gmra.mrb[0].mxu0 %v1485
        %v1608 = vpop.f32.mrb[0].mxu0
        %v1609 = vadd.f32 0.0, %v1608
        %v1610 = vpop.f32.mrb[0].mxu0
        %1611 = vmatprep.mubr.f32.mxu0 0.0
        %1612 = vmatmul.mubr.f32.gmra.mrb[0].mxu0 %v1488
        %v1613 = vpop.f32.mrb[0].mxu0
        %v1614 = vadd.f32 0.0, %v1613
        %v1615 = vpop.f32.mrb[0].mxu0
        %1616 = vmatprep.mubr.f32.mxu0 0.0
        %1617 = vmatmul.mubr.f32.gmra.mrb[0].mxu0 %v1491
        %v1618 = vpop.f32.mrb[0].mxu0
        %v1619 = vadd.f32 0.0, %v1618
        %v1620 = vpop.f32.mrb[0].mxu0
        %1621 = vmatprep.mubr.f32.mxu0 0.0
        %1622 = vmatmul.mubr.f32.gmra.mrb[0].mxu0 %v1494
        %v1623 = vpop.f32.mrb[0].mxu0
        %v1624 = vadd.f32 0.0, %v1623
        %v1625 = vpop.f32.mrb[0].mxu0
        %1626 = vmatprep.mubr.f32.mxu0 0.0
        %1627 = vmatmul.mubr.f32.gmra.mrb[0].mxu0 %v1497
        %v1628 = vpop.f32.mrb[0].mxu0
        %v1629 = vadd.f32 0.0, %v1628
        %v1630 = vpop.f32.mrb[0].mxu0
        %1631 = vmatprep.mubr.f32.mxu0 0.0
        %1632 = vmatmul.mubr.f32.gmra.mrb[0].mxu0 %v1500
        %v1633 = vpop.f32.mrb[0].mxu0
        %v1634 = vadd.f32 0.0, %v1633
        %v1635 = vpop.f32.mrb[0].mxu0
        %1636 = vmatprep.mubr.f32.mxu0 0.0
        %1637 = vmatmul.mubr.f32.gmra.mrb[0].mxu0 %v1503
        %v1638 = vpop.f32.mrb[0].mxu0
        %v1639 = vadd.f32 0.0, %v1638
        %v1640 = vpop.f32.mrb[0].mxu0
        %1641 = vmatprep.mubr.f32.mxu0 0.0
        %1642 = vmatmul.mubr.f32.gmra.mrb[0].mxu0 %v1506
        %v1643 = vpop.f32.mrb[0].mxu0
        %v1644 = vadd.f32 0.0, %v1643
        %v1645 = vpop.f32.mrb[0].mxu0
        %1646 = vmatprep.mubr.f32.mxu0 0.0
        %1647 = vmatmul.mubr.f32.gmra.mrb[0].mxu0 %v1509
        %v1648 = vpop.f32.mrb[0].mxu0
        %v1649 = vadd.f32 0.0, %v1648
        %v1650 = vpop.f32.mrb[0].mxu0
        %1651 = vmatprep.mubr.f32.mxu0 0.0
        %1652 = vmatmul.mubr.f32.gmra.mrb[0].mxu0 %v1512
        %v1653 = vpop.f32.mrb[0].mxu0
        %v1654 = vadd.f32 0.0, %v1653
        %v1655 = vpop.f32.mrb[0].mxu0
        %1656 = vmatprep.mubr.f32.mxu0 0.0
        %1657 = vmatmul.mubr.f32.gmra.mrb[0].mxu0 %v1515
        %v1658 = vpop.f32.mrb[0].mxu0
        %v1659 = vadd.f32 0.0, %v1658
        %v1660 = vpop.f32.mrb[0].mxu0
        %1661 = vdwg.mxu0
        %1662 = vst.msk [vmem:[#allocation2] sm:$0xff] %vm287, %v1584
        %1663 = vst.msk [vmem:[#allocation2 + $0x8] sm:$0xff] %vm287, %v1589
        %1664 = vst.msk [vmem:[#allocation2 + $0x10] sm:$0xff] %vm287, %v1594
        %1665 = vst.msk [vmem:[#allocation2 + $0x18] sm:$0xff] %vm287, %v1599
        %1666 = vst.msk [vmem:[#allocation2 + $0x20] sm:$0xff] %vm287, %v1604
        %1667 = vst.msk [vmem:[#allocation2 + $0x28] sm:$0xff] %vm287, %v1609
        %1668 = vst.msk [vmem:[#allocation2 + $0x30] sm:$0xff] %vm287, %v1614
        %1669 = vst.msk [vmem:[#allocation2 + $0x38] sm:$0xff] %vm287, %v1619
        %1670 = vst.msk [vmem:[#allocation2 + $0x40] sm:$0xff] %vm287, %v1624
        %1671 = vst.msk [vmem:[#allocation2 + $0x48] sm:$0xff] %vm287, %v1629
        %1672 = vst.msk [vmem:[#allocation2 + $0x50] sm:$0xff] %vm287, %v1634
        %1673 = vst.msk [vmem:[#allocation2 + $0x58] sm:$0xff] %vm287, %v1639
        %1674 = vst.msk [vmem:[#allocation2 + $0x60] sm:$0xff] %vm287, %v1644
        %1675 = vst.msk [vmem:[#allocation2 + $0x68] sm:$0xff] %vm287, %v1649
        %1676 = vst.msk [vmem:[#allocation2 + $0x70] sm:$0xff] %vm287, %v1654
        %1677 = vst.msk [vmem:[#allocation2 + $0x78] sm:$0xff] %vm287, %v1659
        %1694 = vrot.lane.b32.xlu0 %v1584, 96
        %v1695 = vpop.permute.xlu0 %1694
        %1696 = vrot.lane.b32.xlu0 %v1589, 96
        %v1697 = vpop.permute.xlu0 %1696
        %1698 = vrot.lane.b32.xlu0 %v1594, 96
        %v1699 = vpop.permute.xlu0 %1698
        %1700 = vrot.lane.b32.xlu0 %v1599, 96
        %v1701 = vpop.permute.xlu0 %1700
        %1702 = vrot.lane.b32.xlu0 %v1604, 96
        %v1703 = vpop.permute.xlu0 %1702
        %1704 = vrot.lane.b32.xlu0 %v1609, 96
        %v1705 = vpop.permute.xlu0 %1704
        %1706 = vrot.lane.b32.xlu0 %v1614, 96
        %v1707 = vpop.permute.xlu0 %1706
        %1708 = vrot.lane.b32.xlu0 %v1619, 96
        %v1709 = vpop.permute.xlu0 %1708
        %1710 = vrot.lane.b32.xlu0 %v1624, 96
        %v1711 = vpop.permute.xlu0 %1710
        %1712 = vrot.lane.b32.xlu0 %v1629, 96
        %v1713 = vpop.permute.xlu0 %1712
        %1714 = vrot.lane.b32.xlu0 %v1634, 96
        %v1715 = vpop.permute.xlu0 %1714
        %1716 = vrot.lane.b32.xlu0 %v1639, 96
        %v1717 = vpop.permute.xlu0 %1716
        %1718 = vrot.lane.b32.xlu0 %v1644, 96
        %v1719 = vpop.permute.xlu0 %1718
        %1720 = vrot.lane.b32.xlu0 %v1649, 96
        %v1721 = vpop.permute.xlu0 %1720
        %1722 = vrot.lane.b32.xlu0 %v1654, 96
        %v1723 = vpop.permute.xlu0 %1722
        %1724 = vrot.lane.b32.xlu0 %v1659, 96
        %v1725 = vpop.permute.xlu0 %1724
        %1742 = vst.msk [vmem:[#allocation2 + $0x80] sm:$0xff] %vm287, %v1695
        %1743 = vst.msk [vmem:[#allocation2 + $0x88] sm:$0xff] %vm287, %v1697
        %1744 = vst.msk [vmem:[#allocation2 + $0x90] sm:$0xff] %vm287, %v1699
        %1745 = vst.msk [vmem:[#allocation2 + $0x98] sm:$0xff] %vm287, %v1701
        %1746 = vst.msk [vmem:[#allocation2 + $0xa0] sm:$0xff] %vm287, %v1703
        %1747 = vst.msk [vmem:[#allocation2 + $0xa8] sm:$0xff] %vm287, %v1705
        %1748 = vst.msk [vmem:[#allocation2 + $0xb0] sm:$0xff] %vm287, %v1707
        %1749 = vst.msk [vmem:[#allocation2 + $0xb8] sm:$0xff] %vm287, %v1709
        %1750 = vst.msk [vmem:[#allocation2 + $0xc0] sm:$0xff] %vm287, %v1711
        %1751 = vst.msk [vmem:[#allocation2 + $0xc8] sm:$0xff] %vm287, %v1713
        %1752 = vst.msk [vmem:[#allocation2 + $0xd0] sm:$0xff] %vm287, %v1715
        %1753 = vst.msk [vmem:[#allocation2 + $0xd8] sm:$0xff] %vm287, %v1717
        %1754 = vst.msk [vmem:[#allocation2 + $0xe0] sm:$0xff] %vm287, %v1719
        %1755 = vst.msk [vmem:[#allocation2 + $0xe8] sm:$0xff] %vm287, %v1721
        %1756 = vst.msk [vmem:[#allocation2 + $0xf0] sm:$0xff] %vm287, %v1723
        %1757 = vst.msk [vmem:[#allocation2 + $0xf8] sm:$0xff] %vm287, %v1725
        %v1758 = vld [vmem:[%s1] sm:$0xff]
        %v1759 = vld [vmem:[%s1 + $0x8] sm:$0xff]
        %v1760 = vld [vmem:[%s1 + $0x10] sm:$0xff]
        %v1761 = vld [vmem:[%s1 + $0x18] sm:$0xff]
        %v1762 = vld [vmem:[%s1 + $0x20] sm:$0xff]
        %v1763 = vld [vmem:[%s1 + $0x28] sm:$0xff]
        %v1764 = vld [vmem:[%s1 + $0x30] sm:$0xff]
        %v1765 = vld [vmem:[%s1 + $0x38] sm:$0xff]
        %v1766 = vld [vmem:[%s1 + $0x40] sm:$0xff]
        %v1767 = vld [vmem:[%s1 + $0x48] sm:$0xff]
        %v1768 = vld [vmem:[%s1 + $0x50] sm:$0xff]
        %v1769 = vld [vmem:[%s1 + $0x58] sm:$0xff]
        %v1770 = vld [vmem:[%s1 + $0x60] sm:$0xff]
        %v1771 = vld [vmem:[%s1 + $0x68] sm:$0xff]
        %v1772 = vld [vmem:[%s1 + $0x70] sm:$0xff]
        %v1773 = vld [vmem:[%s1 + $0x78] sm:$0xff]
        %v1774 = vld [vmem:[%s1 + $0x80] sm:$0xff]
        %v1775 = vld [vmem:[%s1 + $0x88] sm:$0xff]
        %v1776 = vld [vmem:[%s1 + $0x90] sm:$0xff]
        %v1777 = vld [vmem:[%s1 + $0x98] sm:$0xff]
        %v1778 = vld [vmem:[%s1 + $0xa0] sm:$0xff]
        %v1779 = vld [vmem:[%s1 + $0xa8] sm:$0xff]
        %v1780 = vld [vmem:[%s1 + $0xb0] sm:$0xff]
        %v1781 = vld [vmem:[%s1 + $0xb8] sm:$0xff]
        %v1782 = vld [vmem:[%s1 + $0xc0] sm:$0xff]
        %v1783 = vld [vmem:[%s1 + $0xc8] sm:$0xff]
        %v1784 = vld [vmem:[%s1 + $0xd0] sm:$0xff]
        %v1785 = vld [vmem:[%s1 + $0xd8] sm:$0xff]
        %v1786 = vld [vmem:[%s1 + $0xe0] sm:$0xff]
        %v1787 = vld [vmem:[%s1 + $0xe8] sm:$0xff]
        %v1788 = vld [vmem:[%s1 + $0xf0] sm:$0xff]
        %v1789 = vld [vmem:[%s1 + $0xf8] sm:$0xff]
        %v1790 = vld [vmem:[#allocation2] sm:$0xff]
        %v1791 = vld [vmem:[#allocation2 + $0x8] sm:$0xff]
        %v1792 = vld [vmem:[#allocation2 + $0x10] sm:$0xff]
        %v1793 = vld [vmem:[#allocation2 + $0x18] sm:$0xff]
        %v1794 = vld [vmem:[#allocation2 + $0x20] sm:$0xff]
        %v1795 = vld [vmem:[#allocation2 + $0x28] sm:$0xff]
        %v1796 = vld [vmem:[#allocation2 + $0x30] sm:$0xff]
        %v1797 = vld [vmem:[#allocation2 + $0x38] sm:$0xff]
        %v1798 = vld [vmem:[#allocation2 + $0x40] sm:$0xff]
        %v1799 = vld [vmem:[#allocation2 + $0x48] sm:$0xff]
        %v1800 = vld [vmem:[#allocation2 + $0x50] sm:$0xff]
        %v1801 = vld [vmem:[#allocation2 + $0x58] sm:$0xff]
        %v1802 = vld [vmem:[#allocation2 + $0x60] sm:$0xff]
        %v1803 = vld [vmem:[#allocation2 + $0x68] sm:$0xff]
        %v1804 = vld [vmem:[#allocation2 + $0x70] sm:$0xff]
        %v1805 = vld [vmem:[#allocation2 + $0x78] sm:$0xff]
        %v1806 = vld [vmem:[#allocation2 + $0x80] sm:$0xff]
        %v1807 = vld [vmem:[#allocation2 + $0x88] sm:$0xff]
        %v1808 = vld [vmem:[#allocation2 + $0x90] sm:$0xff]
        %v1809 = vld [vmem:[#allocation2 + $0x98] sm:$0xff]
        %v1810 = vld [vmem:[#allocation2 + $0xa0] sm:$0xff]
        %v1811 = vld [vmem:[#allocation2 + $0xa8] sm:$0xff]
        %v1812 = vld [vmem:[#allocation2 + $0xb0] sm:$0xff]
        %v1813 = vld [vmem:[#allocation2 + $0xb8] sm:$0xff]
        %v1814 = vld [vmem:[#allocation2 + $0xc0] sm:$0xff]
        %v1815 = vld [vmem:[#allocation2 + $0xc8] sm:$0xff]
        %v1816 = vld [vmem:[#allocation2 + $0xd0] sm:$0xff]
        %v1817 = vld [vmem:[#allocation2 + $0xd8] sm:$0xff]
        %v1818 = vld [vmem:[#allocation2 + $0xe0] sm:$0xff]
        %v1819 = vld [vmem:[#allocation2 + $0xe8] sm:$0xff]
        %v1820 = vld [vmem:[#allocation2 + $0xf0] sm:$0xff]
        %v1821 = vld [vmem:[#allocation2 + $0xf8] sm:$0xff]
        %1822 = vrot.lane.b32.xlu0 %v1584, 64
        %v1823 = vpop.permute.xlu0 %1822
        %1824 = vrot.lane.b32.xlu0 %v1589, 64
        %v1825 = vpop.permute.xlu0 %1824
        %1826 = vrot.lane.b32.xlu0 %v1594, 64
        %v1827 = vpop.permute.xlu0 %1826
        %1828 = vrot.lane.b32.xlu0 %v1599, 64
        %v1829 = vpop.permute.xlu0 %1828
        %1830 = vrot.lane.b32.xlu0 %v1604, 64
        %v1831 = vpop.permute.xlu0 %1830
        %1832 = vrot.lane.b32.xlu0 %v1609, 64
        %v1833 = vpop.permute.xlu0 %1832
        %1834 = vrot.lane.b32.xlu0 %v1614, 64
        %v1835 = vpop.permute.xlu0 %1834
        %1836 = vrot.lane.b32.xlu0 %v1619, 64
        %v1837 = vpop.permute.xlu0 %1836
        %1838 = vrot.lane.b32.xlu0 %v1624, 64
        %v1839 = vpop.permute.xlu0 %1838
        %1840 = vrot.lane.b32.xlu0 %v1629, 64
        %v1841 = vpop.permute.xlu0 %1840
        %1842 = vrot.lane.b32.xlu0 %v1634, 64
        %v1843 = vpop.permute.xlu0 %1842
        %1844 = vrot.lane.b32.xlu0 %v1639, 64
        %v1845 = vpop.permute.xlu0 %1844
        %1846 = vrot.lane.b32.xlu0 %v1644, 64
        %v1847 = vpop.permute.xlu0 %1846
        %1848 = vrot.lane.b32.xlu0 %v1649, 64
        %v1849 = vpop.permute.xlu0 %1848
        %1850 = vrot.lane.b32.xlu0 %v1654, 64
        %v1851 = vpop.permute.xlu0 %1850
        %1852 = vrot.lane.b32.xlu0 %v1659, 64
        %v1853 = vpop.permute.xlu0 %1852
        %1870 = vmatprep.subr.mxu0 0.0
        %1871 = vmatpush1.msra.mxu0 %v1790
        %1872 = vmatprep.subr.mxu0 0.0
        %1873 = vmatpush1.msra.mxu0 %v1791
        %1874 = vmatprep.subr.mxu0 0.0
        %1875 = vmatpush1.msra.mxu0 %v1792
        %1876 = vmatprep.subr.mxu0 0.0
        %1877 = vmatpush1.msra.mxu0 %v1793
        %1878 = vmatprep.subr.mxu0 0.0
        %1879 = vmatpush1.msra.mxu0 %v1794
        %1880 = vmatprep.subr.mxu0 0.0
        %1881 = vmatpush1.msra.mxu0 %v1795
        %1882 = vmatprep.subr.mxu0 0.0
        %1883 = vmatpush1.msra.mxu0 %v1796
        %1884 = vmatprep.subr.mxu0 0.0
        %1885 = vmatpush1.msra.mxu0 %v1797
        %1886 = vmatprep.subr.mxu0 0.0
        %1887 = vmatpush1.msra.mxu0 %v1798
        %1888 = vmatprep.subr.mxu0 0.0
        %1889 = vmatpush1.msra.mxu0 %v1799
        %1890 = vmatprep.subr.mxu0 0.0
        %1891 = vmatpush1.msra.mxu0 %v1800
        %1892 = vmatprep.subr.mxu0 0.0
        %1893 = vmatpush1.msra.mxu0 %v1801
        %1894 = vmatprep.subr.mxu0 0.0
        %1895 = vmatpush1.msra.mxu0 %v1802
        %1896 = vmatprep.subr.mxu0 0.0
        %1897 = vmatpush1.msra.mxu0 %v1803
        %1898 = vmatprep.subr.mxu0 0.0
        %1899 = vmatpush1.msra.mxu0 %v1804
        %1900 = vmatprep.subr.mxu0 0.0
        %1901 = vmatpush1.msra.mxu0 %v1805
        %1902 = vmatprep.subr.mxu0 0.0
        %1903 = vmatpush1.msra.mxu0 %v1806
        %1904 = vmatprep.subr.mxu0 0.0
        %1905 = vmatpush1.msra.mxu0 %v1807
        %1906 = vmatprep.subr.mxu0 0.0
        %1907 = vmatpush1.msra.mxu0 %v1808
        %1908 = vmatprep.subr.mxu0 0.0
        %1909 = vmatpush1.msra.mxu0 %v1809
        %1910 = vmatprep.subr.mxu0 0.0
        %1911 = vmatpush1.msra.mxu0 %v1810
        %1912 = vmatprep.subr.mxu0 0.0
        %1913 = vmatpush1.msra.mxu0 %v1811
        %1914 = vmatprep.subr.mxu0 0.0
        %1915 = vmatpush1.msra.mxu0 %v1812
        %1916 = vmatprep.subr.mxu0 0.0
        %1917 = vmatpush1.msra.mxu0 %v1813
        %1918 = vmatprep.subr.mxu0 0.0
        %1919 = vmatpush1.msra.mxu0 %v1814
        %1920 = vmatprep.subr.mxu0 0.0
        %1921 = vmatpush1.msra.mxu0 %v1815
        %1922 = vmatprep.subr.mxu0 0.0
        %1923 = vmatpush1.msra.mxu0 %v1816
        %1924 = vmatprep.subr.mxu0 0.0
        %1925 = vmatpush1.msra.mxu0 %v1817
        %1926 = vmatprep.subr.mxu0 0.0
        %1927 = vmatpush1.msra.mxu0 %v1818
        %1928 = vmatprep.subr.mxu0 0.0
        %1929 = vmatpush1.msra.mxu0 %v1819
        %1930 = vmatprep.subr.mxu0 0.0
        %1931 = vmatpush1.msra.mxu0 %v1820
        %1932 = vmatprep.subr.mxu0 0.0
        %1933 = vmatpush1.msra.mxu0 %v1821
        %1934 = vmatprep.mubr.f32.mxu0 %v1759
        %1935 = vmatmul.mubr.f32.gmra.mrb[0].mxu0 %v1758
        %v1936 = vpop.f32.mrb[0].mxu0
        %v1937 = vadd.f32 %v1823, %v1936
        %v1938 = vpop.f32.mrb[0].mxu0
        %1939 = vmatprep.mubr.f32.mxu0 %v1761
        %1940 = vmatmul.mubr.f32.gmra.mrb[0].mxu0 %v1760
        %v1941 = vpop.f32.mrb[0].mxu0
        %v1942 = vadd.f32 %v1825, %v1941
        %v1943 = vpop.f32.mrb[0].mxu0
        %1944 = vmatprep.mubr.f32.mxu0 %v1763
        %1945 = vmatmul.mubr.f32.gmra.mrb[0].mxu0 %v1762
        %v1946 = vpop.f32.mrb[0].mxu0
        %v1947 = vadd.f32 %v1827, %v1946
        %v1948 = vpop.f32.mrb[0].mxu0
        %1949 = vmatprep.mubr.f32.mxu0 %v1765
        %1950 = vmatmul.mubr.f32.gmra.mrb[0].mxu0 %v1764
        %v1951 = vpop.f32.mrb[0].mxu0
        %v1952 = vadd.f32 %v1829, %v1951
        %v1953 = vpop.f32.mrb[0].mxu0
        %1954 = vmatprep.mubr.f32.mxu0 %v1767
        %1955 = vmatmul.mubr.f32.gmra.mrb[0].mxu0 %v1766
        %v1956 = vpop.f32.mrb[0].mxu0
        %v1957 = vadd.f32 %v1831, %v1956
        %v1958 = vpop.f32.mrb[0].mxu0
        %1959 = vmatprep.mubr.f32.mxu0 %v1769
        %1960 = vmatmul.mubr.f32.gmra.mrb[0].mxu0 %v1768
        %v1961 = vpop.f32.mrb[0].mxu0
        %v1962 = vadd.f32 %v1833, %v1961
        %v1963 = vpop.f32.mrb[0].mxu0
        %1964 = vmatprep.mubr.f32.mxu0 %v1771
        %1965 = vmatmul.mubr.f32.gmra.mrb[0].mxu0 %v1770
        %v1966 = vpop.f32.mrb[0].mxu0
        %v1967 = vadd.f32 %v1835, %v1966
        %v1968 = vpop.f32.mrb[0].mxu0
        %1969 = vmatprep.mubr.f32.mxu0 %v1773
        %1970 = vmatmul.mubr.f32.gmra.mrb[0].mxu0 %v1772
        %v1971 = vpop.f32.mrb[0].mxu0
        %v1972 = vadd.f32 %v1837, %v1971
        %v1973 = vpop.f32.mrb[0].mxu0
        %1974 = vmatprep.mubr.f32.mxu0 %v1775
        %1975 = vmatmul.mubr.f32.gmra.mrb[0].mxu0 %v1774
        %v1976 = vpop.f32.mrb[0].mxu0
        %v1977 = vadd.f32 %v1839, %v1976
        %v1978 = vpop.f32.mrb[0].mxu0
        %1979 = vmatprep.mubr.f32.mxu0 %v1777
        %1980 = vmatmul.mubr.f32.gmra.mrb[0].mxu0 %v1776
        %v1981 = vpop.f32.mrb[0].mxu0
        %v1982 = vadd.f32 %v1841, %v1981
        %v1983 = vpop.f32.mrb[0].mxu0
        %1984 = vmatprep.mubr.f32.mxu0 %v1779
        %1985 = vmatmul.mubr.f32.gmra.mrb[0].mxu0 %v1778
        %v1986 = vpop.f32.mrb[0].mxu0
        %v1987 = vadd.f32 %v1843, %v1986
        %v1988 = vpop.f32.mrb[0].mxu0
        %1989 = vmatprep.mubr.f32.mxu0 %v1781
        %1990 = vmatmul.mubr.f32.gmra.mrb[0].mxu0 %v1780
        %v1991 = vpop.f32.mrb[0].mxu0
        %v1992 = vadd.f32 %v1845, %v1991
        %v1993 = vpop.f32.mrb[0].mxu0
        %1994 = vmatprep.mubr.f32.mxu0 %v1783
        %1995 = vmatmul.mubr.f32.gmra.mrb[0].mxu0 %v1782
        %v1996 = vpop.f32.mrb[0].mxu0
        %v1997 = vadd.f32 %v1847, %v1996
        %v1998 = vpop.f32.mrb[0].mxu0
        %1999 = vmatprep.mubr.f32.mxu0 %v1785
        %2000 = vmatmul.mubr.f32.gmra.mrb[0].mxu0 %v1784
        %v2001 = vpop.f32.mrb[0].mxu0
        %v2002 = vadd.f32 %v1849, %v2001
        %v2003 = vpop.f32.mrb[0].mxu0
        %2004 = vmatprep.mubr.f32.mxu0 %v1787
        %2005 = vmatmul.mubr.f32.gmra.mrb[0].mxu0 %v1786
        %v2006 = vpop.f32.mrb[0].mxu0
        %v2007 = vadd.f32 %v1851, %v2006
        %v2008 = vpop.f32.mrb[0].mxu0
        %2009 = vmatprep.mubr.f32.mxu0 %v1789
        %2010 = vmatmul.mubr.f32.gmra.mrb[0].mxu0 %v1788
        %v2011 = vpop.f32.mrb[0].mxu0
        %v2012 = vadd.f32 %v1853, %v2011
        %v2013 = vpop.f32.mrb[0].mxu0
        %2014 = vdwg.mxu0
        %s2015 = scalar_lea.vmem %s4, 2
        %v2016 = vld [vmem:[%s2015] sm:$0x1]
        %v2018 = vlaneseq
        %v2019 = vshrl.u32 %v2018, 7
        %v2020 = vsub.s32 0, %v2019
        %v2021 = vrot.slane %v2016, %v2020
        %v2023 = vadd.f32 %v1937, %v2021
        %v2024 = vadd.f32 %v1942, %v2021
        %v2025 = vadd.f32 %v1947, %v2021
        %v2026 = vadd.f32 %v1952, %v2021
        %v2027 = vadd.f32 %v1957, %v2021
        %v2028 = vadd.f32 %v1962, %v2021
        %v2029 = vadd.f32 %v1967, %v2021
        %v2030 = vadd.f32 %v1972, %v2021
        %v2031 = vadd.f32 %v1977, %v2021
        %v2032 = vadd.f32 %v1982, %v2021
        %v2033 = vadd.f32 %v1987, %v2021
        %v2034 = vadd.f32 %v1992, %v2021
        %v2035 = vadd.f32 %v1997, %v2021
        %v2036 = vadd.f32 %v2002, %v2021
        %v2037 = vadd.f32 %v2007, %v2021
        %v2038 = vadd.f32 %v2012, %v2021
        %v2039 = vmax.f32 %v2023, 0.0
        %v2040 = vmax.f32 %v2024, 0.0
        %v2041 = vmax.f32 %v2025, 0.0
        %v2042 = vmax.f32 %v2026, 0.0
        %v2043 = vmax.f32 %v2027, 0.0
        %v2044 = vmax.f32 %v2028, 0.0
        %v2045 = vmax.f32 %v2029, 0.0
        %v2046 = vmax.f32 %v2030, 0.0
        %v2047 = vmax.f32 %v2031, 0.0
        %v2048 = vmax.f32 %v2032, 0.0
        %v2049 = vmax.f32 %v2033, 0.0
        %v2050 = vmax.f32 %v2034, 0.0
        %v2051 = vmax.f32 %v2035, 0.0
        %v2052 = vmax.f32 %v2036, 0.0
        %v2053 = vmax.f32 %v2037, 0.0
        %v2054 = vmax.f32 %v2038, 0.0
        %s2055 = scalar_lea.vmem [#allocation3], 96
        %v2056 = vld [vmem:[%s2055] sm:$0xff]
        %v2057 = vld [vmem:[%s2055 + $0x8] sm:$0xff]
        %v2058 = vld [vmem:[%s2055 + $0x10] sm:$0xff]
        %v2059 = vld [vmem:[%s2055 + $0x18] sm:$0xff]
        %v2061 = vsel %vm287, %v2039, 0
        %v2064 = vsel %vm287, %v2040, 0
        %v2067 = vsel %vm287, %v2041, 0
        %v2070 = vsel %vm287, %v2042, 0
        %v2073 = vsel %vm287, %v2043, 0
        %v2076 = vsel %vm287, %v2044, 0
        %v2079 = vsel %vm287, %v2045, 0
        %v2082 = vsel %vm287, %v2046, 0
        %v2085 = vsel %vm287, %v2047, 0
        %v2088 = vsel %vm287, %v2048, 0
        %v2091 = vsel %vm287, %v2049, 0
        %v2094 = vsel %vm287, %v2050, 0
        %v2097 = vsel %vm287, %v2051, 0
        %v2100 = vsel %vm287, %v2052, 0
        %v2103 = vsel %vm287, %v2053, 0
        %v2106 = vsel %vm287, %v2054, 0
        %2108 = vmatprep.subr.mxu0 0.0
        %2109 = vmatpush1.msra.mxu0 %v2056
        %2110 = vmatprep.subr.mxu0 0.0
        %2111 = vmatpush1.msra.mxu0 %v2057
        %2112 = vmatprep.subr.mxu0 0.0
        %2113 = vmatpush1.msra.mxu0 %v2058
        %2114 = vmatprep.subr.mxu0 0.0
        %2115 = vmatpush1.msra.mxu0 %v2059
        %2116 = vmatprep.subr.mxu0 0.0
        %2117 = vmatpush1.msra.mxu0 0.0
        %2118 = vmatprep.subr.mxu0 0.0
        %2119 = vmatpush1.msra.mxu0 0.0
        %2120 = vmatprep.subr.mxu0 0.0
        %2121 = vmatpush1.msra.mxu0 0.0
        %2122 = vmatprep.subr.mxu0 0.0
        %2123 = vmatpush1.msra.mxu0 0.0
        %2124 = vmatprep.subr.mxu0 0.0
        %2125 = vmatpush1.msra.mxu0 0.0
        %2126 = vmatprep.subr.mxu0 0.0
        %2127 = vmatpush1.msra.mxu0 0.0
        %2128 = vmatprep.subr.mxu0 0.0
        %2129 = vmatpush1.msra.mxu0 0.0
        %2130 = vmatprep.subr.mxu0 0.0
        %2131 = vmatpush1.msra.mxu0 0.0
        %2132 = vmatprep.subr.mxu0 0.0
        %2133 = vmatpush1.msra.mxu0 0.0
        %2134 = vmatprep.subr.mxu0 0.0
        %2135 = vmatpush1.msra.mxu0 0.0
        %2136 = vmatprep.subr.mxu0 0.0
        %2137 = vmatpush1.msra.mxu0 0.0
        %2138 = vmatprep.subr.mxu0 0.0
        %2139 = vmatpush1.msra.mxu0 0.0
        %2140 = vmatprep.subr.mxu0 0.0
        %2141 = vmatpush1.msra.mxu0 0.0
        %2142 = vmatprep.subr.mxu0 0.0
        %2143 = vmatpush1.msra.mxu0 0.0
        %2144 = vmatprep.subr.mxu0 0.0
        %2145 = vmatpush1.msra.mxu0 0.0
        %2146 = vmatprep.subr.mxu0 0.0
        %2147 = vmatpush1.msra.mxu0 0.0
        %2148 = vmatprep.subr.mxu0 0.0
        %2149 = vmatpush1.msra.mxu0 0.0
        %2150 = vmatprep.subr.mxu0 0.0
        %2151 = vmatpush1.msra.mxu0 0.0
        %2152 = vmatprep.subr.mxu0 0.0
        %2153 = vmatpush1.msra.mxu0 0.0
        %2154 = vmatprep.subr.mxu0 0.0
        %2155 = vmatpush1.msra.mxu0 0.0
        %2156 = vmatprep.subr.mxu0 0.0
        %2157 = vmatpush1.msra.mxu0 0.0
        %2158 = vmatprep.subr.mxu0 0.0
        %2159 = vmatpush1.msra.mxu0 0.0
        %2160 = vmatprep.subr.mxu0 0.0
        %2161 = vmatpush1.msra.mxu0 0.0
        %2162 = vmatprep.subr.mxu0 0.0
        %2163 = vmatpush1.msra.mxu0 0.0
        %2164 = vmatprep.subr.mxu0 0.0
        %2165 = vmatpush1.msra.mxu0 0.0
        %2166 = vmatprep.subr.mxu0 0.0
        %2167 = vmatpush1.msra.mxu0 0.0
        %2168 = vmatprep.subr.mxu0 0.0
        %2169 = vmatpush1.msra.mxu0 0.0
        %2170 = vmatprep.subr.mxu0 0.0
        %2171 = vmatpush1.msra.mxu0 0.0
        %2172 = vmatprep.mubr.f32.mxu0 0.0
        %2173 = vmatmul.mubr.f32.gmra.mrb[0].mxu0 %v2061
        %v2174 = vpop.f32.mrb[0].mxu0
        %v2175 = vadd.f32 0.0, %v2174
        %v2176 = vpop.f32.mrb[0].mxu0
        %2177 = vmatprep.mubr.f32.mxu0 0.0
        %2178 = vmatmul.mubr.f32.gmra.mrb[0].mxu0 %v2064
        %v2179 = vpop.f32.mrb[0].mxu0
        %v2180 = vadd.f32 0.0, %v2179
        %v2181 = vpop.f32.mrb[0].mxu0
        %2182 = vmatprep.mubr.f32.mxu0 0.0
        %2183 = vmatmul.mubr.f32.gmra.mrb[0].mxu0 %v2067
        %v2184 = vpop.f32.mrb[0].mxu0
        %v2185 = vadd.f32 0.0, %v2184
        %v2186 = vpop.f32.mrb[0].mxu0
        %2187 = vmatprep.mubr.f32.mxu0 0.0
        %2188 = vmatmul.mubr.f32.gmra.mrb[0].mxu0 %v2070
        %v2189 = vpop.f32.mrb[0].mxu0
        %v2190 = vadd.f32 0.0, %v2189
        %v2191 = vpop.f32.mrb[0].mxu0
        %2192 = vmatprep.mubr.f32.mxu0 0.0
        %2193 = vmatmul.mubr.f32.gmra.mrb[0].mxu0 %v2073
        %v2194 = vpop.f32.mrb[0].mxu0
        %v2195 = vadd.f32 0.0, %v2194
        %v2196 = vpop.f32.mrb[0].mxu0
        %2197 = vmatprep.mubr.f32.mxu0 0.0
        %2198 = vmatmul.mubr.f32.gmra.mrb[0].mxu0 %v2076
        %v2199 = vpop.f32.mrb[0].mxu0
        %v2200 = vadd.f32 0.0, %v2199
        %v2201 = vpop.f32.mrb[0].mxu0
        %2202 = vmatprep.mubr.f32.mxu0 0.0
        %2203 = vmatmul.mubr.f32.gmra.mrb[0].mxu0 %v2079
        %v2204 = vpop.f32.mrb[0].mxu0
        %v2205 = vadd.f32 0.0, %v2204
        %v2206 = vpop.f32.mrb[0].mxu0
        %2207 = vmatprep.mubr.f32.mxu0 0.0
        %2208 = vmatmul.mubr.f32.gmra.mrb[0].mxu0 %v2082
        %v2209 = vpop.f32.mrb[0].mxu0
        %v2210 = vadd.f32 0.0, %v2209
        %v2211 = vpop.f32.mrb[0].mxu0
        %2212 = vmatprep.mubr.f32.mxu0 0.0
        %2213 = vmatmul.mubr.f32.gmra.mrb[0].mxu0 %v2085
        %v2214 = vpop.f32.mrb[0].mxu0
        %v2215 = vadd.f32 0.0, %v2214
        %v2216 = vpop.f32.mrb[0].mxu0
        %2217 = vmatprep.mubr.f32.mxu0 0.0
        %2218 = vmatmul.mubr.f32.gmra.mrb[0].mxu0 %v2088
        %v2219 = vpop.f32.mrb[0].mxu0
        %v2220 = vadd.f32 0.0, %v2219
        %v2221 = vpop.f32.mrb[0].mxu0
        %2222 = vmatprep.mubr.f32.mxu0 0.0
        %2223 = vmatmul.mubr.f32.gmra.mrb[0].mxu0 %v2091
        %v2224 = vpop.f32.mrb[0].mxu0
        %v2225 = vadd.f32 0.0, %v2224
        %v2226 = vpop.f32.mrb[0].mxu0
        %2227 = vmatprep.mubr.f32.mxu0 0.0
        %2228 = vmatmul.mubr.f32.gmra.mrb[0].mxu0 %v2094
        %v2229 = vpop.f32.mrb[0].mxu0
        %v2230 = vadd.f32 0.0, %v2229
        %v2231 = vpop.f32.mrb[0].mxu0
        %2232 = vmatprep.mubr.f32.mxu0 0.0
        %2233 = vmatmul.mubr.f32.gmra.mrb[0].mxu0 %v2097
        %v2234 = vpop.f32.mrb[0].mxu0
        %v2235 = vadd.f32 0.0, %v2234
        %v2236 = vpop.f32.mrb[0].mxu0
        %2237 = vmatprep.mubr.f32.mxu0 0.0
        %2238 = vmatmul.mubr.f32.gmra.mrb[0].mxu0 %v2100
        %v2239 = vpop.f32.mrb[0].mxu0
        %v2240 = vadd.f32 0.0, %v2239
        %v2241 = vpop.f32.mrb[0].mxu0
        %2242 = vmatprep.mubr.f32.mxu0 0.0
        %2243 = vmatmul.mubr.f32.gmra.mrb[0].mxu0 %v2103
        %v2244 = vpop.f32.mrb[0].mxu0
        %v2245 = vadd.f32 0.0, %v2244
        %v2246 = vpop.f32.mrb[0].mxu0
        %2247 = vmatprep.mubr.f32.mxu0 0.0
        %2248 = vmatmul.mubr.f32.gmra.mrb[0].mxu0 %v2106
        %v2249 = vpop.f32.mrb[0].mxu0
        %v2250 = vadd.f32 0.0, %v2249
        %v2251 = vpop.f32.mrb[0].mxu0
        %2252 = vdwg.mxu0
        %2253 = vst.msk [vmem:[#allocation2] sm:$0xff] %vm287, %v2175
        %2254 = vst.msk [vmem:[#allocation2 + $0x8] sm:$0xff] %vm287, %v2180
        %2255 = vst.msk [vmem:[#allocation2 + $0x10] sm:$0xff] %vm287, %v2185
        %2256 = vst.msk [vmem:[#allocation2 + $0x18] sm:$0xff] %vm287, %v2190
        %2257 = vst.msk [vmem:[#allocation2 + $0x20] sm:$0xff] %vm287, %v2195
        %2258 = vst.msk [vmem:[#allocation2 + $0x28] sm:$0xff] %vm287, %v2200
        %2259 = vst.msk [vmem:[#allocation2 + $0x30] sm:$0xff] %vm287, %v2205
        %2260 = vst.msk [vmem:[#allocation2 + $0x38] sm:$0xff] %vm287, %v2210
        %2261 = vst.msk [vmem:[#allocation2 + $0x40] sm:$0xff] %vm287, %v2215
        %2262 = vst.msk [vmem:[#allocation2 + $0x48] sm:$0xff] %vm287, %v2220
        %2263 = vst.msk [vmem:[#allocation2 + $0x50] sm:$0xff] %vm287, %v2225
        %2264 = vst.msk [vmem:[#allocation2 + $0x58] sm:$0xff] %vm287, %v2230
        %2265 = vst.msk [vmem:[#allocation2 + $0x60] sm:$0xff] %vm287, %v2235
        %2266 = vst.msk [vmem:[#allocation2 + $0x68] sm:$0xff] %vm287, %v2240
        %2267 = vst.msk [vmem:[#allocation2 + $0x70] sm:$0xff] %vm287, %v2245
        %2268 = vst.msk [vmem:[#allocation2 + $0x78] sm:$0xff] %vm287, %v2250
        %2285 = vrot.lane.b32.xlu0 %v2175, 96
        %v2286 = vpop.permute.xlu0 %2285
        %2287 = vrot.lane.b32.xlu0 %v2180, 96
        %v2288 = vpop.permute.xlu0 %2287
        %2289 = vrot.lane.b32.xlu0 %v2185, 96
        %v2290 = vpop.permute.xlu0 %2289
        %2291 = vrot.lane.b32.xlu0 %v2190, 96
        %v2292 = vpop.permute.xlu0 %2291
        %2293 = vrot.lane.b32.xlu0 %v2195, 96
        %v2294 = vpop.permute.xlu0 %2293
        %2295 = vrot.lane.b32.xlu0 %v2200, 96
        %v2296 = vpop.permute.xlu0 %2295
        %2297 = vrot.lane.b32.xlu0 %v2205, 96
        %v2298 = vpop.permute.xlu0 %2297
        %2299 = vrot.lane.b32.xlu0 %v2210, 96
        %v2300 = vpop.permute.xlu0 %2299
        %2301 = vrot.lane.b32.xlu0 %v2215, 96
        %v2302 = vpop.permute.xlu0 %2301
        %2303 = vrot.lane.b32.xlu0 %v2220, 96
        %v2304 = vpop.permute.xlu0 %2303
        %2305 = vrot.lane.b32.xlu0 %v2225, 96
        %v2306 = vpop.permute.xlu0 %2305
        %2307 = vrot.lane.b32.xlu0 %v2230, 96
        %v2308 = vpop.permute.xlu0 %2307
        %2309 = vrot.lane.b32.xlu0 %v2235, 96
        %v2310 = vpop.permute.xlu0 %2309
        %2311 = vrot.lane.b32.xlu0 %v2240, 96
        %v2312 = vpop.permute.xlu0 %2311
        %2313 = vrot.lane.b32.xlu0 %v2245, 96
        %v2314 = vpop.permute.xlu0 %2313
        %2315 = vrot.lane.b32.xlu0 %v2250, 96
        %v2316 = vpop.permute.xlu0 %2315
        %2333 = vst.msk [vmem:[#allocation2 + $0x80] sm:$0xff] %vm287, %v2286
        %2334 = vst.msk [vmem:[#allocation2 + $0x88] sm:$0xff] %vm287, %v2288
        %2335 = vst.msk [vmem:[#allocation2 + $0x90] sm:$0xff] %vm287, %v2290
        %2336 = vst.msk [vmem:[#allocation2 + $0x98] sm:$0xff] %vm287, %v2292
        %2337 = vst.msk [vmem:[#allocation2 + $0xa0] sm:$0xff] %vm287, %v2294
        %2338 = vst.msk [vmem:[#allocation2 + $0xa8] sm:$0xff] %vm287, %v2296
        %2339 = vst.msk [vmem:[#allocation2 + $0xb0] sm:$0xff] %vm287, %v2298
        %2340 = vst.msk [vmem:[#allocation2 + $0xb8] sm:$0xff] %vm287, %v2300
        %2341 = vst.msk [vmem:[#allocation2 + $0xc0] sm:$0xff] %vm287, %v2302
        %2342 = vst.msk [vmem:[#allocation2 + $0xc8] sm:$0xff] %vm287, %v2304
        %2343 = vst.msk [vmem:[#allocation2 + $0xd0] sm:$0xff] %vm287, %v2306
        %2344 = vst.msk [vmem:[#allocation2 + $0xd8] sm:$0xff] %vm287, %v2308
        %2345 = vst.msk [vmem:[#allocation2 + $0xe0] sm:$0xff] %vm287, %v2310
        %2346 = vst.msk [vmem:[#allocation2 + $0xe8] sm:$0xff] %vm287, %v2312
        %2347 = vst.msk [vmem:[#allocation2 + $0xf0] sm:$0xff] %vm287, %v2314
        %2348 = vst.msk [vmem:[#allocation2 + $0xf8] sm:$0xff] %vm287, %v2316
        %v2349 = vld [vmem:[%s1] sm:$0xff]
        %v2350 = vld [vmem:[%s1 + $0x8] sm:$0xff]
        %v2351 = vld [vmem:[%s1 + $0x10] sm:$0xff]
        %v2352 = vld [vmem:[%s1 + $0x18] sm:$0xff]
        %v2353 = vld [vmem:[%s1 + $0x20] sm:$0xff]
        %v2354 = vld [vmem:[%s1 + $0x28] sm:$0xff]
        %v2355 = vld [vmem:[%s1 + $0x30] sm:$0xff]
        %v2356 = vld [vmem:[%s1 + $0x38] sm:$0xff]
        %v2357 = vld [vmem:[%s1 + $0x40] sm:$0xff]
        %v2358 = vld [vmem:[%s1 + $0x48] sm:$0xff]
        %v2359 = vld [vmem:[%s1 + $0x50] sm:$0xff]
        %v2360 = vld [vmem:[%s1 + $0x58] sm:$0xff]
        %v2361 = vld [vmem:[%s1 + $0x60] sm:$0xff]
        %v2362 = vld [vmem:[%s1 + $0x68] sm:$0xff]
        %v2363 = vld [vmem:[%s1 + $0x70] sm:$0xff]
        %v2364 = vld [vmem:[%s1 + $0x78] sm:$0xff]
        %v2365 = vld [vmem:[%s1 + $0x80] sm:$0xff]
        %v2366 = vld [vmem:[%s1 + $0x88] sm:$0xff]
        %v2367 = vld [vmem:[%s1 + $0x90] sm:$0xff]
        %v2368 = vld [vmem:[%s1 + $0x98] sm:$0xff]
        %v2369 = vld [vmem:[%s1 + $0xa0] sm:$0xff]
        %v2370 = vld [vmem:[%s1 + $0xa8] sm:$0xff]
        %v2371 = vld [vmem:[%s1 + $0xb0] sm:$0xff]
        %v2372 = vld [vmem:[%s1 + $0xb8] sm:$0xff]
        %v2373 = vld [vmem:[%s1 + $0xc0] sm:$0xff]
        %v2374 = vld [vmem:[%s1 + $0xc8] sm:$0xff]
        %v2375 = vld [vmem:[%s1 + $0xd0] sm:$0xff]
        %v2376 = vld [vmem:[%s1 + $0xd8] sm:$0xff]
        %v2377 = vld [vmem:[%s1 + $0xe0] sm:$0xff]
        %v2378 = vld [vmem:[%s1 + $0xe8] sm:$0xff]
        %v2379 = vld [vmem:[%s1 + $0xf0] sm:$0xff]
        %v2380 = vld [vmem:[%s1 + $0xf8] sm:$0xff]
        %v2381 = vld [vmem:[#allocation2] sm:$0xff]
        %v2382 = vld [vmem:[#allocation2 + $0x8] sm:$0xff]
        %v2383 = vld [vmem:[#allocation2 + $0x10] sm:$0xff]
        %v2384 = vld [vmem:[#allocation2 + $0x18] sm:$0xff]
        %v2385 = vld [vmem:[#allocation2 + $0x20] sm:$0xff]
        %v2386 = vld [vmem:[#allocation2 + $0x28] sm:$0xff]
        %v2387 = vld [vmem:[#allocation2 + $0x30] sm:$0xff]
        %v2388 = vld [vmem:[#allocation2 + $0x38] sm:$0xff]
        %v2389 = vld [vmem:[#allocation2 + $0x40] sm:$0xff]
        %v2390 = vld [vmem:[#allocation2 + $0x48] sm:$0xff]
        %v2391 = vld [vmem:[#allocation2 + $0x50] sm:$0xff]
        %v2392 = vld [vmem:[#allocation2 + $0x58] sm:$0xff]
        %v2393 = vld [vmem:[#allocation2 + $0x60] sm:$0xff]
        %v2394 = vld [vmem:[#allocation2 + $0x68] sm:$0xff]
        %v2395 = vld [vmem:[#allocation2 + $0x70] sm:$0xff]
        %v2396 = vld [vmem:[#allocation2 + $0x78] sm:$0xff]
        %v2397 = vld [vmem:[#allocation2 + $0x80] sm:$0xff]
        %v2398 = vld [vmem:[#allocation2 + $0x88] sm:$0xff]
        %v2399 = vld [vmem:[#allocation2 + $0x90] sm:$0xff]
        %v2400 = vld [vmem:[#allocation2 + $0x98] sm:$0xff]
        %v2401 = vld [vmem:[#allocation2 + $0xa0] sm:$0xff]
        %v2402 = vld [vmem:[#allocation2 + $0xa8] sm:$0xff]
        %v2403 = vld [vmem:[#allocation2 + $0xb0] sm:$0xff]
        %v2404 = vld [vmem:[#allocation2 + $0xb8] sm:$0xff]
        %v2405 = vld [vmem:[#allocation2 + $0xc0] sm:$0xff]
        %v2406 = vld [vmem:[#allocation2 + $0xc8] sm:$0xff]
        %v2407 = vld [vmem:[#allocation2 + $0xd0] sm:$0xff]
        %v2408 = vld [vmem:[#allocation2 + $0xd8] sm:$0xff]
        %v2409 = vld [vmem:[#allocation2 + $0xe0] sm:$0xff]
        %v2410 = vld [vmem:[#allocation2 + $0xe8] sm:$0xff]
        %v2411 = vld [vmem:[#allocation2 + $0xf0] sm:$0xff]
        %v2412 = vld [vmem:[#allocation2 + $0xf8] sm:$0xff]
        %2413 = vrot.lane.b32.xlu0 %v2175, 64
        %v2414 = vpop.permute.xlu0 %2413
        %2415 = vrot.lane.b32.xlu0 %v2180, 64
        %v2416 = vpop.permute.xlu0 %2415
        %2417 = vrot.lane.b32.xlu0 %v2185, 64
        %v2418 = vpop.permute.xlu0 %2417
        %2419 = vrot.lane.b32.xlu0 %v2190, 64
        %v2420 = vpop.permute.xlu0 %2419
        %2421 = vrot.lane.b32.xlu0 %v2195, 64
        %v2422 = vpop.permute.xlu0 %2421
        %2423 = vrot.lane.b32.xlu0 %v2200, 64
        %v2424 = vpop.permute.xlu0 %2423
        %2425 = vrot.lane.b32.xlu0 %v2205, 64
        %v2426 = vpop.permute.xlu0 %2425
        %2427 = vrot.lane.b32.xlu0 %v2210, 64
        %v2428 = vpop.permute.xlu0 %2427
        %2429 = vrot.lane.b32.xlu0 %v2215, 64
        %v2430 = vpop.permute.xlu0 %2429
        %2431 = vrot.lane.b32.xlu0 %v2220, 64
        %v2432 = vpop.permute.xlu0 %2431
        %2433 = vrot.lane.b32.xlu0 %v2225, 64
        %v2434 = vpop.permute.xlu0 %2433
        %2435 = vrot.lane.b32.xlu0 %v2230, 64
        %v2436 = vpop.permute.xlu0 %2435
        %2437 = vrot.lane.b32.xlu0 %v2235, 64
        %v2438 = vpop.permute.xlu0 %2437
        %2439 = vrot.lane.b32.xlu0 %v2240, 64
        %v2440 = vpop.permute.xlu0 %2439
        %2441 = vrot.lane.b32.xlu0 %v2245, 64
        %v2442 = vpop.permute.xlu0 %2441
        %2443 = vrot.lane.b32.xlu0 %v2250, 64
        %v2444 = vpop.permute.xlu0 %2443
        %2461 = vmatprep.subr.mxu0 0.0
        %2462 = vmatpush1.msra.mxu0 %v2381
        %2463 = vmatprep.subr.mxu0 0.0
        %2464 = vmatpush1.msra.mxu0 %v2382
        %2465 = vmatprep.subr.mxu0 0.0
        %2466 = vmatpush1.msra.mxu0 %v2383
        %2467 = vmatprep.subr.mxu0 0.0
        %2468 = vmatpush1.msra.mxu0 %v2384
        %2469 = vmatprep.subr.mxu0 0.0
        %2470 = vmatpush1.msra.mxu0 %v2385
        %2471 = vmatprep.subr.mxu0 0.0
        %2472 = vmatpush1.msra.mxu0 %v2386
        %2473 = vmatprep.subr.mxu0 0.0
        %2474 = vmatpush1.msra.mxu0 %v2387
        %2475 = vmatprep.subr.mxu0 0.0
        %2476 = vmatpush1.msra.mxu0 %v2388
        %2477 = vmatprep.subr.mxu0 0.0
        %2478 = vmatpush1.msra.mxu0 %v2389
        %2479 = vmatprep.subr.mxu0 0.0
        %2480 = vmatpush1.msra.mxu0 %v2390
        %2481 = vmatprep.subr.mxu0 0.0
        %2482 = vmatpush1.msra.mxu0 %v2391
        %2483 = vmatprep.subr.mxu0 0.0
        %2484 = vmatpush1.msra.mxu0 %v2392
        %2485 = vmatprep.subr.mxu0 0.0
        %2486 = vmatpush1.msra.mxu0 %v2393
        %2487 = vmatprep.subr.mxu0 0.0
        %2488 = vmatpush1.msra.mxu0 %v2394
        %2489 = vmatprep.subr.mxu0 0.0
        %2490 = vmatpush1.msra.mxu0 %v2395
        %2491 = vmatprep.subr.mxu0 0.0
        %2492 = vmatpush1.msra.mxu0 %v2396
        %2493 = vmatprep.subr.mxu0 0.0
        %2494 = vmatpush1.msra.mxu0 %v2397
        %2495 = vmatprep.subr.mxu0 0.0
        %2496 = vmatpush1.msra.mxu0 %v2398
        %2497 = vmatprep.subr.mxu0 0.0
        %2498 = vmatpush1.msra.mxu0 %v2399
        %2499 = vmatprep.subr.mxu0 0.0
        %2500 = vmatpush1.msra.mxu0 %v2400
        %2501 = vmatprep.subr.mxu0 0.0
        %2502 = vmatpush1.msra.mxu0 %v2401
        %2503 = vmatprep.subr.mxu0 0.0
        %2504 = vmatpush1.msra.mxu0 %v2402
        %2505 = vmatprep.subr.mxu0 0.0
        %2506 = vmatpush1.msra.mxu0 %v2403
        %2507 = vmatprep.subr.mxu0 0.0
        %2508 = vmatpush1.msra.mxu0 %v2404
        %2509 = vmatprep.subr.mxu0 0.0
        %2510 = vmatpush1.msra.mxu0 %v2405
        %2511 = vmatprep.subr.mxu0 0.0
        %2512 = vmatpush1.msra.mxu0 %v2406
        %2513 = vmatprep.subr.mxu0 0.0
        %2514 = vmatpush1.msra.mxu0 %v2407
        %2515 = vmatprep.subr.mxu0 0.0
        %2516 = vmatpush1.msra.mxu0 %v2408
        %2517 = vmatprep.subr.mxu0 0.0
        %2518 = vmatpush1.msra.mxu0 %v2409
        %2519 = vmatprep.subr.mxu0 0.0
        %2520 = vmatpush1.msra.mxu0 %v2410
        %2521 = vmatprep.subr.mxu0 0.0
        %2522 = vmatpush1.msra.mxu0 %v2411
        %2523 = vmatprep.subr.mxu0 0.0
        %2524 = vmatpush1.msra.mxu0 %v2412
        %2525 = vmatprep.mubr.f32.mxu0 %v2350
        %2526 = vmatmul.mubr.f32.gmra.mrb[0].mxu0 %v2349
        %v2527 = vpop.f32.mrb[0].mxu0
        %v2528 = vadd.f32 %v2414, %v2527
        %v2529 = vpop.f32.mrb[0].mxu0
        %2530 = vmatprep.mubr.f32.mxu0 %v2352
        %2531 = vmatmul.mubr.f32.gmra.mrb[0].mxu0 %v2351
        %v2532 = vpop.f32.mrb[0].mxu0
        %v2533 = vadd.f32 %v2416, %v2532
        %v2534 = vpop.f32.mrb[0].mxu0
        %2535 = vmatprep.mubr.f32.mxu0 %v2354
        %2536 = vmatmul.mubr.f32.gmra.mrb[0].mxu0 %v2353
        %v2537 = vpop.f32.mrb[0].mxu0
        %v2538 = vadd.f32 %v2418, %v2537
        %v2539 = vpop.f32.mrb[0].mxu0
        %2540 = vmatprep.mubr.f32.mxu0 %v2356
        %2541 = vmatmul.mubr.f32.gmra.mrb[0].mxu0 %v2355
        %v2542 = vpop.f32.mrb[0].mxu0
        %v2543 = vadd.f32 %v2420, %v2542
        %v2544 = vpop.f32.mrb[0].mxu0
        %2545 = vmatprep.mubr.f32.mxu0 %v2358
        %2546 = vmatmul.mubr.f32.gmra.mrb[0].mxu0 %v2357
        %v2547 = vpop.f32.mrb[0].mxu0
        %v2548 = vadd.f32 %v2422, %v2547
        %v2549 = vpop.f32.mrb[0].mxu0
        %2550 = vmatprep.mubr.f32.mxu0 %v2360
        %2551 = vmatmul.mubr.f32.gmra.mrb[0].mxu0 %v2359
        %v2552 = vpop.f32.mrb[0].mxu0
        %v2553 = vadd.f32 %v2424, %v2552
        %v2554 = vpop.f32.mrb[0].mxu0
        %2555 = vmatprep.mubr.f32.mxu0 %v2362
        %2556 = vmatmul.mubr.f32.gmra.mrb[0].mxu0 %v2361
        %v2557 = vpop.f32.mrb[0].mxu0
        %v2558 = vadd.f32 %v2426, %v2557
        %v2559 = vpop.f32.mrb[0].mxu0
        %2560 = vmatprep.mubr.f32.mxu0 %v2364
        %2561 = vmatmul.mubr.f32.gmra.mrb[0].mxu0 %v2363
        %v2562 = vpop.f32.mrb[0].mxu0
        %v2563 = vadd.f32 %v2428, %v2562
        %v2564 = vpop.f32.mrb[0].mxu0
        %2565 = vmatprep.mubr.f32.mxu0 %v2366
        %2566 = vmatmul.mubr.f32.gmra.mrb[0].mxu0 %v2365
        %v2567 = vpop.f32.mrb[0].mxu0
        %v2568 = vadd.f32 %v2430, %v2567
        %v2569 = vpop.f32.mrb[0].mxu0
        %2570 = vmatprep.mubr.f32.mxu0 %v2368
        %2571 = vmatmul.mubr.f32.gmra.mrb[0].mxu0 %v2367
        %v2572 = vpop.f32.mrb[0].mxu0
        %v2573 = vadd.f32 %v2432, %v2572
        %v2574 = vpop.f32.mrb[0].mxu0
        %2575 = vmatprep.mubr.f32.mxu0 %v2370
        %2576 = vmatmul.mubr.f32.gmra.mrb[0].mxu0 %v2369
        %v2577 = vpop.f32.mrb[0].mxu0
        %v2578 = vadd.f32 %v2434, %v2577
        %v2579 = vpop.f32.mrb[0].mxu0
        %2580 = vmatprep.mubr.f32.mxu0 %v2372
        %2581 = vmatmul.mubr.f32.gmra.mrb[0].mxu0 %v2371
        %v2582 = vpop.f32.mrb[0].mxu0
        %v2583 = vadd.f32 %v2436, %v2582
        %v2584 = vpop.f32.mrb[0].mxu0
        %2585 = vmatprep.mubr.f32.mxu0 %v2374
        %2586 = vmatmul.mubr.f32.gmra.mrb[0].mxu0 %v2373
        %v2587 = vpop.f32.mrb[0].mxu0
        %v2588 = vadd.f32 %v2438, %v2587
        %v2589 = vpop.f32.mrb[0].mxu0
        %2590 = vmatprep.mubr.f32.mxu0 %v2376
        %2591 = vmatmul.mubr.f32.gmra.mrb[0].mxu0 %v2375
        %v2592 = vpop.f32.mrb[0].mxu0
        %v2593 = vadd.f32 %v2440, %v2592
        %v2594 = vpop.f32.mrb[0].mxu0
        %2595 = vmatprep.mubr.f32.mxu0 %v2378
        %2596 = vmatmul.mubr.f32.gmra.mrb[0].mxu0 %v2377
        %v2597 = vpop.f32.mrb[0].mxu0
        %v2598 = vadd.f32 %v2442, %v2597
        %v2599 = vpop.f32.mrb[0].mxu0
        %2600 = vmatprep.mubr.f32.mxu0 %v2380
        %2601 = vmatmul.mubr.f32.gmra.mrb[0].mxu0 %v2379
        %v2602 = vpop.f32.mrb[0].mxu0
        %v2603 = vadd.f32 %v2444, %v2602
        %v2604 = vpop.f32.mrb[0].mxu0
        %2605 = vdwg.mxu0
        %s2606 = scalar_lea.vmem %s4, 3
        %v2607 = vld [vmem:[%s2606] sm:$0x1]
        %v2609 = vlaneseq
        %v2610 = vshrl.u32 %v2609, 7
        %v2611 = vsub.s32 0, %v2610
        %v2612 = vrot.slane %v2607, %v2611
        %v2614 = vadd.f32 %v2528, %v2612
        %v2615 = vadd.f32 %v2533, %v2612
        %v2616 = vadd.f32 %v2538, %v2612
        %v2617 = vadd.f32 %v2543, %v2612
        %v2618 = vadd.f32 %v2548, %v2612
        %v2619 = vadd.f32 %v2553, %v2612
        %v2620 = vadd.f32 %v2558, %v2612
        %v2621 = vadd.f32 %v2563, %v2612
        %v2622 = vadd.f32 %v2568, %v2612
        %v2623 = vadd.f32 %v2573, %v2612
        %v2624 = vadd.f32 %v2578, %v2612
        %v2625 = vadd.f32 %v2583, %v2612
        %v2626 = vadd.f32 %v2588, %v2612
        %v2627 = vadd.f32 %v2593, %v2612
        %v2628 = vadd.f32 %v2598, %v2612
        %v2629 = vadd.f32 %v2603, %v2612
        %v2630 = vmax.f32 %v2614, 0.0
        %v2631 = vmax.f32 %v2615, 0.0
        %v2632 = vmax.f32 %v2616, 0.0
        %v2633 = vmax.f32 %v2617, 0.0
        %v2634 = vmax.f32 %v2618, 0.0
        %v2635 = vmax.f32 %v2619, 0.0
        %v2636 = vmax.f32 %v2620, 0.0
        %v2637 = vmax.f32 %v2621, 0.0
        %v2638 = vmax.f32 %v2622, 0.0
        %v2639 = vmax.f32 %v2623, 0.0
        %v2640 = vmax.f32 %v2624, 0.0
        %v2641 = vmax.f32 %v2625, 0.0
        %v2642 = vmax.f32 %v2626, 0.0
        %v2643 = vmax.f32 %v2627, 0.0
        %v2644 = vmax.f32 %v2628, 0.0
        %v2645 = vmax.f32 %v2629, 0.0
        %v2646 = vld [vmem:[%s2] sm:$0xff]
        %2647 = vmatprep.subr.mxu0 0.0
        %2648 = vmatpush1.msra.mxu0 %v2630
        %2649 = vmatprep.subr.mxu0 0.0
        %2650 = vmatpush1.msra.mxu0 %v2631
        %2651 = vmatprep.subr.mxu0 0.0
        %2652 = vmatpush1.msra.mxu0 %v2632
        %2653 = vmatprep.subr.mxu0 0.0
        %2654 = vmatpush1.msra.mxu0 %v2633
        %2655 = vmatprep.subr.mxu0 0.0
        %2656 = vmatpush1.msra.mxu0 %v2634
        %2657 = vmatprep.subr.mxu0 0.0
        %2658 = vmatpush1.msra.mxu0 %v2635
        %2659 = vmatprep.subr.mxu0 0.0
        %2660 = vmatpush1.msra.mxu0 %v2636
        %2661 = vmatprep.subr.mxu0 0.0
        %2662 = vmatpush1.msra.mxu0 %v2637
        %2663 = vmatprep.subr.mxu0 0.0
        %2664 = vmatpush1.msra.mxu0 %v2638
        %2665 = vmatprep.subr.mxu0 0.0
        %2666 = vmatpush1.msra.mxu0 %v2639
        %2667 = vmatprep.subr.mxu0 0.0
        %2668 = vmatpush1.msra.mxu0 %v2640
        %2669 = vmatprep.subr.mxu0 0.0
        %2670 = vmatpush1.msra.mxu0 %v2641
        %2671 = vmatprep.subr.mxu0 0.0
        %2672 = vmatpush1.msra.mxu0 %v2642
        %2673 = vmatprep.subr.mxu0 0.0
        %2674 = vmatpush1.msra.mxu0 %v2643
        %2675 = vmatprep.subr.mxu0 0.0
        %2676 = vmatpush1.msra.mxu0 %v2644
        %2677 = vmatprep.subr.mxu0 0.0
        %2678 = vmatpush1.msra.mxu0 %v2645
        %2679 = vmatprep.subr.mxu0 0.0
        %2680 = vmatpush1.msra.mxu0 0.0
        %2681 = vmatprep.subr.mxu0 0.0
        %2682 = vmatpush1.msra.mxu0 0.0
        %2683 = vmatprep.subr.mxu0 0.0
        %2684 = vmatpush1.msra.mxu0 0.0
        %2685 = vmatprep.subr.mxu0 0.0
        %2686 = vmatpush1.msra.mxu0 0.0
        %2687 = vmatprep.subr.mxu0 0.0
        %2688 = vmatpush1.msra.mxu0 0.0
        %2689 = vmatprep.subr.mxu0 0.0
        %2690 = vmatpush1.msra.mxu0 0.0
        %2691 = vmatprep.subr.mxu0 0.0
        %2692 = vmatpush1.msra.mxu0 0.0
        %2693 = vmatprep.subr.mxu0 0.0
        %2694 = vmatpush1.msra.mxu0 0.0
        %2695 = vmatprep.subr.mxu0 0.0
        %2696 = vmatpush1.msra.mxu0 0.0
        %2697 = vmatprep.subr.mxu0 0.0
        %2698 = vmatpush1.msra.mxu0 0.0
        %2699 = vmatprep.subr.mxu0 0.0
        %2700 = vmatpush1.msra.mxu0 0.0
        %2701 = vmatprep.subr.mxu0 0.0
        %2702 = vmatpush1.msra.mxu0 0.0
        %2703 = vmatprep.subr.mxu0 0.0
        %2704 = vmatpush1.msra.mxu0 0.0
        %2705 = vmatprep.subr.mxu0 0.0
        %2706 = vmatpush1.msra.mxu0 0.0
        %2707 = vmatprep.subr.mxu0 0.0
        %2708 = vmatpush1.msra.mxu0 0.0
        %2709 = vmatprep.subr.mxu0 0.0
        %2710 = vmatpush1.msra.mxu0 0.0
        %2711 = vmatprep.mubr.f32.mxu0 0.0
        %2712 = vmatmul.mubr.f32.gmra.mrb[0].mxu0 %v2646
        %v2713 = vpop.f32.mrb[0].mxu0
        %v2714 = vadd.f32 0.0, %v2713
        %v2715 = vpop.f32.mrb[0].mxu0
        %2716 = vdwg.mxu0
        %v2717 = vld [vmem:[%s5] sm:$0xff]
        %v2718 = vld [vmem:[%s5 + $0x8] sm:$0xff]
        %v2719 = vld [vmem:[%s5 + $0x10] sm:$0xff]
        %v2720 = vld [vmem:[%s5 + $0x18] sm:$0xff]
        %v2721 = vld [vmem:[%s5 + $0x20] sm:$0x1]
        %v2722 = vlaneseq
        %v2723 = vshrl.u32 %v2722, 7
        %v2724 = vsub.s32 0, %v2723
        %v2725 = vrot.slane %v2721, %v2724
        %v2727 = vsel %vm287, %v2714, 0
        %2729 = vmatprep.subr.mxu0 0.0
        %2730 = vmatpush1.msra.mxu0 %v2717
        %2731 = vmatprep.subr.mxu0 0.0
        %2732 = vmatpush1.msra.mxu0 %v2718
        %2733 = vmatprep.subr.mxu0 0.0
        %2734 = vmatpush1.msra.mxu0 %v2719
        %2735 = vmatprep.subr.mxu0 0.0
        %2736 = vmatpush1.msra.mxu0 %v2720
        %2737 = vmatprep.subr.mxu0 0.0
        %2738 = vmatpush1.msra.mxu0 0.0
        %2739 = vmatprep.subr.mxu0 0.0
        %2740 = vmatpush1.msra.mxu0 0.0
        %2741 = vmatprep.subr.mxu0 0.0
        %2742 = vmatpush1.msra.mxu0 0.0
        %2743 = vmatprep.subr.mxu0 0.0
        %2744 = vmatpush1.msra.mxu0 0.0
        %2745 = vmatprep.subr.mxu0 0.0
        %2746 = vmatpush1.msra.mxu0 0.0
        %2747 = vmatprep.subr.mxu0 0.0
        %2748 = vmatpush1.msra.mxu0 0.0
        %2749 = vmatprep.subr.mxu0 0.0
        %2750 = vmatpush1.msra.mxu0 0.0
        %2751 = vmatprep.subr.mxu0 0.0
        %2752 = vmatpush1.msra.mxu0 0.0
        %2753 = vmatprep.subr.mxu0 0.0
        %2754 = vmatpush1.msra.mxu0 0.0
        %2755 = vmatprep.subr.mxu0 0.0
        %2756 = vmatpush1.msra.mxu0 0.0
        %2757 = vmatprep.subr.mxu0 0.0
        %2758 = vmatpush1.msra.mxu0 0.0
        %2759 = vmatprep.subr.mxu0 0.0
        %2760 = vmatpush1.msra.mxu0 0.0
        %2761 = vmatprep.subr.mxu0 0.0
        %2762 = vmatpush1.msra.mxu0 0.0
        %2763 = vmatprep.subr.mxu0 0.0
        %2764 = vmatpush1.msra.mxu0 0.0
        %2765 = vmatprep.subr.mxu0 0.0
        %2766 = vmatpush1.msra.mxu0 0.0
        %2767 = vmatprep.subr.mxu0 0.0
        %2768 = vmatpush1.msra.mxu0 0.0
        %2769 = vmatprep.subr.mxu0 0.0
        %2770 = vmatpush1.msra.mxu0 0.0
        %2771 = vmatprep.subr.mxu0 0.0
        %2772 = vmatpush1.msra.mxu0 0.0
        %2773 = vmatprep.subr.mxu0 0.0
        %2774 = vmatpush1.msra.mxu0 0.0
        %2775 = vmatprep.subr.mxu0 0.0
        %2776 = vmatpush1.msra.mxu0 0.0
        %2777 = vmatprep.subr.mxu0 0.0
        %2778 = vmatpush1.msra.mxu0 0.0
        %2779 = vmatprep.subr.mxu0 0.0
        %2780 = vmatpush1.msra.mxu0 0.0
        %2781 = vmatprep.subr.mxu0 0.0
        %2782 = vmatpush1.msra.mxu0 0.0
        %2783 = vmatprep.subr.mxu0 0.0
        %2784 = vmatpush1.msra.mxu0 0.0
        %2785 = vmatprep.subr.mxu0 0.0
        %2786 = vmatpush1.msra.mxu0 0.0
        %2787 = vmatprep.subr.mxu0 0.0
        %2788 = vmatpush1.msra.mxu0 0.0
        %2789 = vmatprep.subr.mxu0 0.0
        %2790 = vmatpush1.msra.mxu0 0.0
        %2791 = vmatprep.subr.mxu0 0.0
        %2792 = vmatpush1.msra.mxu0 0.0
        %2793 = vmatprep.mubr.f32.mxu0 0.0
        %2794 = vmatmul.mubr.f32.gmra.mrb[0].mxu0 %v2727
        %v2795 = vpop.f32.mrb[0].mxu0
        %v2796 = vadd.f32 %v2725, %v2795
        %v2797 = vpop.f32.mrb[0].mxu0
        %2798 = vdwg.mxu0
        %v2799 = vmax.f32 %v2796, 0.0
        %2800 = vst [vmem:[%s260] sm:$0xff] %v2799
        %s2801 = sand.u32 %s160, 1
        %s2802 = scalar_lea.sflag [#allocation5], %s2801
        %s2803 = sand.u32 %s160, 1
        %s2804 = smul.addr %s2803, 8
        %s2805 = scalar_lea.vmem [#allocation6], %s2804
        // Predicated region
        $region49: #{tpu_custom_call.1} parent=43 // pred_check
          %p2806 = pneg %p170
        $region50: #{tpu_custom_call.1} parent=43 // pred_check_branch
          %2808 = sbr.rel (%p2806) target = $region52
        $region51: #{tpu_custom_call.1} parent=43 // pred_region
          %s2810 = ssub.s32 128, 128
          %2811 = vsyncadd %s2802, %s2810
          %s2812 = smul.addr %s21, 128
          %s2813 = scalar_lea.hbm %s6, %s2812
          %s2815 = sshll.u32 %s2805, 4
          %s2816 = int_to_ptr.vmem [resolvable:$true] %s2815
          %2818 = dma.vmem_to_hbm [thread:$0]  %s2816, 128, %s2813, %s2802
        $region52: #{tpu_custom_call.1} parent=43 // pred_fallthru
          _
      $region44: #{tpu_custom_call.1} parent=5 // pred_fallthru
        _
      %p2819 = scmp.le.s32.totalorder 2, %s16
      // Predicated region
      $region53: #{tpu_custom_call.1} parent=5 // pred_check
        %p2820 = pneg %p2819
      $region54: #{tpu_custom_call.1} parent=5 // pred_check_branch
        %2822 = sbr.rel (%p2820) target = $region56
      $region55: #{tpu_custom_call.1} parent=5 // pred_region
        %s2823 = ssub.s32 %s16, 2
        // Predicated region
        $region57: #{tpu_custom_call.1} parent=55 // pred_check
          %p2824 = pneg %p176
        $region58: #{tpu_custom_call.1} parent=55 // pred_check_branch
          %2826 = sbr.rel (%p2824) target = $region60
        $region59: #{tpu_custom_call.1} parent=55 // pred_region
          %s2827 = sand.u32 %s161, 1
          %s2828 = scalar_lea.sflag [#allocation5], %s2827
          %s2829 = sand.u32 %s161, 1
          %s2830 = smul.addr %s2829, 8
          %s2831 = scalar_lea.vmem [#allocation6], %s2830
          %2832 = dma.done %s2828, 128
        $region60: #{tpu_custom_call.1} parent=55 // pred_fallthru
          _
      $region56: #{tpu_custom_call.1} parent=5 // pred_fallthru
        _
    $region6: #{tpu_custom_call.1} parent=1 // loop_footer
      %s20 = sadd.s32 1, %s16
    $region7: #{tpu_custom_call.1} parent=1 // loop_footer_branch
      %15 = sbr.rel target = $region3
    $region8: #{tpu_custom_call.1} parent=1 // loop_exit
      _
    %2833 = vsyncpa [#allocation4], 1
    %s2834 = scalar_lea.sflag [#allocation4], 1
    %2835 = vsyncpa %s2834, 1
    %2836 = vsyncpa [#allocation5], 1
    %s2837 = scalar_lea.sflag [#allocation5], 1
    %2838 = vsyncpa %s2837, 1

</llo_original>
